<compile_context>
chip_gen: v6e
topology: v6e:2x2x1
jax: 0.10.0
libtpu: 0.0.40
codegen_flags: <defaults>
</compile_context>

<pallas_src>
import jax
import jax.numpy as jnp
from jax import lax
from jax.experimental import pallas as pl
from jax.experimental.pallas import tpu as pltpu

HEAD_SIZE = [[2], [1], [2]]            # M.head_size
HEAD_OUT = sum(HEAD_SIZE, [])          # [2, 1, 2]
NUM_CLASS = sum(HEAD_OUT)              # 5


def _round_up(x, k):
    return (x + k - 1) // k * k


def multitask_head_forward(x_nchw, params, use_bf16=False):
    """x_nchw: (N, Cin, H, W) float32.  Returns (N, NUM_CLASS, H, W), matching PyTorch."""
    N, Cin, H, W = x_nchw.shape
    m = Cin // 4
    M_tot = len(HEAD_OUT) * m
    C_out = NUM_CLASS
    Mp = _round_up(M_tot, 8)          # sublane-pad hidden channels
    Cp = _round_up(C_out, 8)          # sublane-pad output channels

    # ---- padded-image flattening (in-kernel im2col support) -------------------
    Hp, Wp = H + 2, W + 2
    # Output is computed over flattened positions p = i*Wp + j (row stride Wp); a 3x3
    # tap (dy,dx) is then simply position p + dy*Wp + dx of the same flattened slab.
    Lq = _round_up(H * Wp, 128)                       # output lanes (128-aligned)
    Lin = _round_up(max(Hp * Wp, Lq + 2 * Wp + 2), 128)  # input lanes (all taps in-bounds)

    x_pad = jnp.pad(x_nchw, ((0, 0), (0, 0), (1, 1), (1, 1)))      # (N, Cin, Hp, Wp)
    x_flat = x_pad.reshape(N, Cin, Hp * Wp)
    x_flat = jnp.pad(x_flat, ((0, 0), (0, 0), (0, Lin - Hp * Wp)))  # (N, Cin, Lin)

    # ---- parameter fusion (plain JAX glue) -------------------------------------
    # conv1 weights per tap: (9, M_tot, Cin); tap index t = dy*3 + dx.
    w1_taps = jnp.concatenate(
        [jnp.transpose(p["w1"], (2, 3, 0, 1)).reshape(9, m, Cin) for p in params],
        axis=1)                                                    # (9, M_tot, Cin)
    w1_taps = jnp.pad(w1_taps, ((0, 0), (0, Mp - M_tot), (0, 0)))  # (9, Mp, Cin)
    b1_f = jnp.pad(jnp.concatenate([p["b1"] for p in params]),
                   (0, Mp - M_tot)).reshape(Mp, 1)

    # conv2 (1x1) fused block-diagonal:  out = w2_f @ hidden  (reproduces channel concat)
    w2_f = jnp.zeros((Cp, Mp), jnp.float32)
    off = 0
    for i, p in enumerate(params):
        oc = p["w2"].shape[0]
        w2_f = w2_f.at[off:off + oc, i * m:(i + 1) * m].set(p["w2"][:, :, 0, 0])
        off += oc
    b2_f = jnp.pad(jnp.concatenate([p["b2"] for p in params]),
                   (0, Cp - C_out)).reshape(Cp, 1)

    if use_bf16:  # MXU operands only; element-wise math stays f32 inside the kernel.
        x_flat = x_flat.astype(jnp.bfloat16)
        w1_taps = w1_taps.astype(jnp.bfloat16)
        w2_f = w2_f.astype(jnp.bfloat16)

    # ---- kernel (one image per grid step; spatial on lanes everywhere) ---------
    def kernel(x_ref, w1_ref, b1_ref, w2_ref, b2_ref, o_ref):
        # x_ref: (Cin, Lin)  flattened zero-padded image (row stride Wp)
        # w1_ref: (9, Mp, Cin), b1_ref: (Mp, 1), w2_ref: (Cp, Mp), b2_ref: (Cp, 1)
        # o_ref: (Cp, Lq)
        acc = jnp.zeros((Mp, Lq), jnp.float32)
        for t in range(9):                       # in-kernel im2col: 9 shifted windows
            dy, dx = t // 3, t % 3
            s = dy * Wp + dx                     # static lane shift for this tap
            acc = acc + jnp.dot(w1_ref[t], x_ref[:, s:s + Lq],
                                preferred_element_type=jnp.float32)
        hidden = jnp.maximum(acc + b1_ref[...], 0.0)           # f32 bias + ReLU
        out = jnp.dot(w2_ref[...], hidden.astype(w2_ref.dtype),
                      preferred_element_type=jnp.float32) + b2_ref[...]
        o_ref[...] = out.astype(o_ref.dtype)

    itm = jnp.dtype(x_flat.dtype).itemsize
    cost = pl.CostEstimate(
        flops=N * (2 * Mp * 9 * Cin * Lq + 2 * Cp * Mp * Lq),
        transcendentals=0,
        bytes_accessed=(N * Cin * Lin * itm + 9 * Mp * Cin * itm + Cp * Mp * itm
                        + (Mp + Cp) * 4 + N * Cp * Lq * 4),
    )

    out = pl.pallas_call(
        kernel,
        out_shape=jax.ShapeDtypeStruct((N, Cp, Lq), jnp.float32),
        grid_spec=pltpu.PrefetchScalarGridSpec(
            num_scalar_prefetch=0,
            grid=(N,),
            in_specs=[
                pl.BlockSpec((pl.Squeezed(), Cin, Lin), lambda n: (n, 0, 0)),
                pl.BlockSpec((9, Mp, Cin), lambda n: (0, 0, 0)),
                pl.BlockSpec((Mp, 1), lambda n: (0, 0)),
                pl.BlockSpec((Cp, Mp), lambda n: (0, 0)),
                pl.BlockSpec((Cp, 1), lambda n: (0, 0)),
            ],
            out_specs=pl.BlockSpec((pl.Squeezed(), Cp, Lq), lambda n: (n, 0, 0)),
        ),
        compiler_params=pltpu.CompilerParams(
            dimension_semantics=("parallel",)),
        cost_estimate=cost,
    )(x_flat, w1_taps, b1_f, w2_f, b2_f)

    # Drop channel padding, reshape lanes back to (H, Wp) and cut the 2 halo columns.
    out = out[:, :C_out, :H * Wp].reshape(N, C_out, H, Wp)[..., :W]
    return out


def _init_params(key, input_channels):
    m = input_channels // 4
    params = []
    for oc in HEAD_OUT:
        key, k1, k2, k3, k4 = jax.random.split(key, 5)
        params.append({
            "w1": 0.1 * jax.random.normal(k1, (m, input_channels, 3, 3), jnp.float32),
            "b1": 0.1 * jax.random.normal(k2, (m,), jnp.float32),
            "w2": 0.1 * jax.random.normal(k3, (oc, m, 1, 1), jnp.float32),
            "b2": 0.1 * jax.random.normal(k4, (oc,), jnp.float32),
        })
    return params


def _reference_forward(x_nchw, params):
    """Pure-JAX reference matching the PyTorch module (NCHW convs)."""
    outs = []
    dn = ("NCHW", "OIHW", "NCHW")
    for p in params:
        h = lax.conv_general_dilated(x_nchw, p["w1"], (1, 1), "SAME",
                                     dimension_numbers=dn)
        h = jnp.maximum(h + p["b1"][None, :, None, None], 0.0)
        o = lax.conv_general_dilated(h, p["w2"], (1, 1), "SAME",
                                     dimension_numbers=dn)
        outs.append(o + p["b2"][None, :, None, None])
    return jnp.concatenate(outs, axis=1)


if __name__ == "__main__":
    key = jax.random.PRNGKey(0)
    kx, kp = jax.random.split(key)

    N, Cin, H, W = 2, 16, 16, 16          # input_channels=16 -> m=4; num_class=5
    x = jax.random.normal(kx, (N, Cin, H, W), jnp.float32)
    params = _init_params(kp, Cin)

    fwd = jax.jit(multitask_head_forward)
    out = jax.block_until_ready(fwd(x, params))

    ref = _reference_forward(x, params)
    assert out.shape == (N, NUM_CLASS, H, W)
    assert jnp.allclose(out, ref, atol=1e-4, rtol=1e-4)

    print("KERNEL_OK")
</pallas_src>

<mosaic_0001>
module attributes {stable_mosaic.version = 11 : i64} {
  func.func @kernel(%arg0: i32, %arg1: memref<1x16x512xf32, #tpu.memory_space<vmem>>, %arg2: memref<9x16x16xf32, #tpu.memory_space<vmem>>, %arg3: memref<16x1xf32, #tpu.memory_space<vmem>>, %arg4: memref<8x16xf32, #tpu.memory_space<vmem>>, %arg5: memref<8x1xf32, #tpu.memory_space<vmem>>, %arg6: memref<1x8x384xf32, #tpu.memory_space<vmem>>) attributes {dimension_semantics = [#tpu.dimension_semantics<parallel>], iteration_bounds = array<i64: 2>, scalar_prefetch = 0 : i64, scratch_operands = 0 : i64, tpu.core_type = #tpu.core_type<tc>, window_params = [{transform_indices = @transform_0, window_bounds = array<i64: 1, 16, 512>}, {pipeline_mode = #tpu.pipeline_mode<synchronous>, transform_indices = @transform_1, window_bounds = array<i64: 9, 16, 16>}, {pipeline_mode = #tpu.pipeline_mode<synchronous>, transform_indices = @transform_2, window_bounds = array<i64: 16, 1>}, {pipeline_mode = #tpu.pipeline_mode<synchronous>, transform_indices = @transform_3, window_bounds = array<i64: 8, 16>}, {pipeline_mode = #tpu.pipeline_mode<synchronous>, transform_indices = @transform_4, window_bounds = array<i64: 8, 1>}, {transform_indices = @transform_5, window_bounds = array<i64: 1, 8, 384>}]} {
    %cst = arith.constant 0.000000e+00 : f32
    %0 = vector.broadcast %cst : f32 to vector<16x384xf32>
    %c0 = arith.constant 0 : index
    %c0_0 = arith.constant 0 : index
    %c0_1 = arith.constant 0 : index
    %1 = vector.load %arg2[%c0, %c0_0, %c0_1] : memref<9x16x16xf32, #tpu.memory_space<vmem>>, vector<1x16x16xf32>
    %2 = vector.shape_cast %1 : vector<1x16x16xf32> to vector<16x16xf32>
    %c0_2 = arith.constant 0 : index
    %c0_3 = arith.constant 0 : index
    %c0_4 = arith.constant 0 : index
    %3 = vector.load %arg1[%c0_2, %c0_3, %c0_4] : memref<1x16x512xf32, #tpu.memory_space<vmem>>, vector<1x16x384xf32>
    %4 = vector.shape_cast %3 : vector<1x16x384xf32> to vector<16x384xf32>
    %cst_5 = arith.constant dense<0.000000e+00> : vector<16x384xf32>
    %5 = tpu.matmul %2, %4, %cst_5 {dimension_numbers = #tpu.dot_dimension_numbers<[1], [0], [0], [1], [0, 0, 1, 1], [], []>} : vector<16x16xf32>, vector<16x384xf32>, vector<16x384xf32> -> vector<16x384xf32>
    %6 = arith.addf %0, %5 : vector<16x384xf32>
    %c1 = arith.constant 1 : index
    %c0_6 = arith.constant 0 : index
    %c0_7 = arith.constant 0 : index
    %7 = vector.load %arg2[%c1, %c0_6, %c0_7] : memref<9x16x16xf32, #tpu.memory_space<vmem>>, vector<1x16x16xf32>
    %8 = vector.shape_cast %7 : vector<1x16x16xf32> to vector<16x16xf32>
    %c0_8 = arith.constant 0 : index
    %c0_9 = arith.constant 0 : index
    %c1_10 = arith.constant 1 : index
    %9 = vector.load %arg1[%c0_8, %c0_9, %c1_10] : memref<1x16x512xf32, #tpu.memory_space<vmem>>, vector<1x16x384xf32>
    %10 = vector.shape_cast %9 : vector<1x16x384xf32> to vector<16x384xf32>
    %cst_11 = arith.constant dense<0.000000e+00> : vector<16x384xf32>
    %11 = tpu.matmul %8, %10, %cst_11 {dimension_numbers = #tpu.dot_dimension_numbers<[1], [0], [0], [1], [0, 0, 1, 1], [], []>} : vector<16x16xf32>, vector<16x384xf32>, vector<16x384xf32> -> vector<16x384xf32>
    %12 = arith.addf %6, %11 : vector<16x384xf32>
    %c2 = arith.constant 2 : index
    %c0_12 = arith.constant 0 : index
    %c0_13 = arith.constant 0 : index
    %13 = vector.load %arg2[%c2, %c0_12, %c0_13] : memref<9x16x16xf32, #tpu.memory_space<vmem>>, vector<1x16x16xf32>
    %14 = vector.shape_cast %13 : vector<1x16x16xf32> to vector<16x16xf32>
    %c0_14 = arith.constant 0 : index
    %c0_15 = arith.constant 0 : index
    %c2_16 = arith.constant 2 : index
    %15 = vector.load %arg1[%c0_14, %c0_15, %c2_16] : memref<1x16x512xf32, #tpu.memory_space<vmem>>, vector<1x16x384xf32>
    %16 = vector.shape_cast %15 : vector<1x16x384xf32> to vector<16x384xf32>
    %cst_17 = arith.constant dense<0.000000e+00> : vector<16x384xf32>
    %17 = tpu.matmul %14, %16, %cst_17 {dimension_numbers = #tpu.dot_dimension_numbers<[1], [0], [0], [1], [0, 0, 1, 1], [], []>} : vector<16x16xf32>, vector<16x384xf32>, vector<16x384xf32> -> vector<16x384xf32>
    %18 = arith.addf %12, %17 : vector<16x384xf32>
    %c3 = arith.constant 3 : index
    %c0_18 = arith.constant 0 : index
    %c0_19 = arith.constant 0 : index
    %19 = vector.load %arg2[%c3, %c0_18, %c0_19] : memref<9x16x16xf32, #tpu.memory_space<vmem>>, vector<1x16x16xf32>
    %20 = vector.shape_cast %19 : vector<1x16x16xf32> to vector<16x16xf32>
    %c0_20 = arith.constant 0 : index
    %c0_21 = arith.constant 0 : index
    %c18 = arith.constant 18 : index
    %21 = vector.load %arg1[%c0_20, %c0_21, %c18] : memref<1x16x512xf32, #tpu.memory_space<vmem>>, vector<1x16x384xf32>
    %22 = vector.shape_cast %21 : vector<1x16x384xf32> to vector<16x384xf32>
    %cst_22 = arith.constant dense<0.000000e+00> : vector<16x384xf32>
    %23 = tpu.matmul %20, %22, %cst_22 {dimension_numbers = #tpu.dot_dimension_numbers<[1], [0], [0], [1], [0, 0, 1, 1], [], []>} : vector<16x16xf32>, vector<16x384xf32>, vector<16x384xf32> -> vector<16x384xf32>
    %24 = arith.addf %18, %23 : vector<16x384xf32>
    %c4 = arith.constant 4 : index
    %c0_23 = arith.constant 0 : index
    %c0_24 = arith.constant 0 : index
    %25 = vector.load %arg2[%c4, %c0_23, %c0_24] : memref<9x16x16xf32, #tpu.memory_space<vmem>>, vector<1x16x16xf32>
    %26 = vector.shape_cast %25 : vector<1x16x16xf32> to vector<16x16xf32>
    %c0_25 = arith.constant 0 : index
    %c0_26 = arith.constant 0 : index
    %c19 = arith.constant 19 : index
    %27 = vector.load %arg1[%c0_25, %c0_26, %c19] : memref<1x16x512xf32, #tpu.memory_space<vmem>>, vector<1x16x384xf32>
    %28 = vector.shape_cast %27 : vector<1x16x384xf32> to vector<16x384xf32>
    %cst_27 = arith.constant dense<0.000000e+00> : vector<16x384xf32>
    %29 = tpu.matmul %26, %28, %cst_27 {dimension_numbers = #tpu.dot_dimension_numbers<[1], [0], [0], [1], [0, 0, 1, 1], [], []>} : vector<16x16xf32>, vector<16x384xf32>, vector<16x384xf32> -> vector<16x384xf32>
    %30 = arith.addf %24, %29 : vector<16x384xf32>
    %c5 = arith.constant 5 : index
    %c0_28 = arith.constant 0 : index
    %c0_29 = arith.constant 0 : index
    %31 = vector.load %arg2[%c5, %c0_28, %c0_29] : memref<9x16x16xf32, #tpu.memory_space<vmem>>, vector<1x16x16xf32>
    %32 = vector.shape_cast %31 : vector<1x16x16xf32> to vector<16x16xf32>
    %c0_30 = arith.constant 0 : index
    %c0_31 = arith.constant 0 : index
    %c20 = arith.constant 20 : index
    %33 = vector.load %arg1[%c0_30, %c0_31, %c20] : memref<1x16x512xf32, #tpu.memory_space<vmem>>, vector<1x16x384xf32>
    %34 = vector.shape_cast %33 : vector<1x16x384xf32> to vector<16x384xf32>
    %cst_32 = arith.constant dense<0.000000e+00> : vector<16x384xf32>
    %35 = tpu.matmul %32, %34, %cst_32 {dimension_numbers = #tpu.dot_dimension_numbers<[1], [0], [0], [1], [0, 0, 1, 1], [], []>} : vector<16x16xf32>, vector<16x384xf32>, vector<16x384xf32> -> vector<16x384xf32>
    %36 = arith.addf %30, %35 : vector<16x384xf32>
    %c6 = arith.constant 6 : index
    %c0_33 = arith.constant 0 : index
    %c0_34 = arith.constant 0 : index
    %37 = vector.load %arg2[%c6, %c0_33, %c0_34] : memref<9x16x16xf32, #tpu.memory_space<vmem>>, vector<1x16x16xf32>
    %38 = vector.shape_cast %37 : vector<1x16x16xf32> to vector<16x16xf32>
    %c0_35 = arith.constant 0 : index
    %c0_36 = arith.constant 0 : index
    %c36 = arith.constant 36 : index
    %39 = vector.load %arg1[%c0_35, %c0_36, %c36] : memref<1x16x512xf32, #tpu.memory_space<vmem>>, vector<1x16x384xf32>
    %40 = vector.shape_cast %39 : vector<1x16x384xf32> to vector<16x384xf32>
    %cst_37 = arith.constant dense<0.000000e+00> : vector<16x384xf32>
    %41 = tpu.matmul %38, %40, %cst_37 {dimension_numbers = #tpu.dot_dimension_numbers<[1], [0], [0], [1], [0, 0, 1, 1], [], []>} : vector<16x16xf32>, vector<16x384xf32>, vector<16x384xf32> -> vector<16x384xf32>
    %42 = arith.addf %36, %41 : vector<16x384xf32>
    %c7 = arith.constant 7 : index
    %c0_38 = arith.constant 0 : index
    %c0_39 = arith.constant 0 : index
    %43 = vector.load %arg2[%c7, %c0_38, %c0_39] : memref<9x16x16xf32, #tpu.memory_space<vmem>>, vector<1x16x16xf32>
    %44 = vector.shape_cast %43 : vector<1x16x16xf32> to vector<16x16xf32>
    %c0_40 = arith.constant 0 : index
    %c0_41 = arith.constant 0 : index
    %c37 = arith.constant 37 : index
    %45 = vector.load %arg1[%c0_40, %c0_41, %c37] : memref<1x16x512xf32, #tpu.memory_space<vmem>>, vector<1x16x384xf32>
    %46 = vector.shape_cast %45 : vector<1x16x384xf32> to vector<16x384xf32>
    %cst_42 = arith.constant dense<0.000000e+00> : vector<16x384xf32>
    %47 = tpu.matmul %44, %46, %cst_42 {dimension_numbers = #tpu.dot_dimension_numbers<[1], [0], [0], [1], [0, 0, 1, 1], [], []>} : vector<16x16xf32>, vector<16x384xf32>, vector<16x384xf32> -> vector<16x384xf32>
    %48 = arith.addf %42, %47 : vector<16x384xf32>
    %c8 = arith.constant 8 : index
    %c0_43 = arith.constant 0 : index
    %c0_44 = arith.constant 0 : index
    %49 = vector.load %arg2[%c8, %c0_43, %c0_44] : memref<9x16x16xf32, #tpu.memory_space<vmem>>, vector<1x16x16xf32>
    %50 = vector.shape_cast %49 : vector<1x16x16xf32> to vector<16x16xf32>
    %c0_45 = arith.constant 0 : index
    %c0_46 = arith.constant 0 : index
    %c38 = arith.constant 38 : index
    %51 = vector.load %arg1[%c0_45, %c0_46, %c38] : memref<1x16x512xf32, #tpu.memory_space<vmem>>, vector<1x16x384xf32>
    %52 = vector.shape_cast %51 : vector<1x16x384xf32> to vector<16x384xf32>
    %cst_47 = arith.constant dense<0.000000e+00> : vector<16x384xf32>
    %53 = tpu.matmul %50, %52, %cst_47 {dimension_numbers = #tpu.dot_dimension_numbers<[1], [0], [0], [1], [0, 0, 1, 1], [], []>} : vector<16x16xf32>, vector<16x384xf32>, vector<16x384xf32> -> vector<16x384xf32>
    %54 = arith.addf %48, %53 : vector<16x384xf32>
    %c0_48 = arith.constant 0 : index
    %c0_49 = arith.constant 0 : index
    %55 = vector.load %arg3[%c0_48, %c0_49] : memref<16x1xf32, #tpu.memory_space<vmem>>, vector<16x1xf32>
    %56 = vector.broadcast %55 : vector<16x1xf32> to vector<16x384xf32>
    %57 = arith.addf %54, %56 : vector<16x384xf32>
    %cst_50 = arith.constant 0.000000e+00 : f32
    %58 = vector.broadcast %cst_50 : f32 to vector<16x384xf32>
    %59 = arith.maximumf %57, %58 : vector<16x384xf32>
    %c0_51 = arith.constant 0 : index
    %c0_52 = arith.constant 0 : index
    %60 = vector.load %arg4[%c0_51, %c0_52] : memref<8x16xf32, #tpu.memory_space<vmem>>, vector<8x16xf32>
    %cst_53 = arith.constant dense<0.000000e+00> : vector<8x384xf32>
    %61 = tpu.matmul %60, %59, %cst_53 {dimension_numbers = #tpu.dot_dimension_numbers<[1], [0], [0], [1], [0, 0, 1, 1], [], []>} : vector<8x16xf32>, vector<16x384xf32>, vector<8x384xf32> -> vector<8x384xf32>
    %c0_54 = arith.constant 0 : index
    %c0_55 = arith.constant 0 : index
    %62 = vector.load %arg5[%c0_54, %c0_55] : memref<8x1xf32, #tpu.memory_space<vmem>>, vector<8x1xf32>
    %63 = vector.broadcast %62 : vector<8x1xf32> to vector<8x384xf32>
    %64 = arith.addf %61, %63 : vector<8x384xf32>
    %c0_56 = arith.constant 0 : index
    %c0_57 = arith.constant 0 : index
    %c0_58 = arith.constant 0 : index
    %65 = vector.load %arg6[%c0_56, %c0_57, %c0_58] : memref<1x8x384xf32, #tpu.memory_space<vmem>>, vector<1x8x384xf32>
    %66 = vector.shape_cast %65 : vector<1x8x384xf32> to vector<8x384xf32>
    %67 = vector.shape_cast %64 : vector<8x384xf32> to vector<1x8x384xf32>
    tpu.vector_store %arg6[%c0_56, %c0_57, %c0_58], %67 {strides = array<i32>} : memref<1x8x384xf32, #tpu.memory_space<vmem>>, vector<1x8x384xf32>,
    return
  }
  func.func @transform_0(%arg0: i32) -> (i32, i32, i32) {
    %c0_i32 = arith.constant 0 : i32
    %c0_i32_0 = arith.constant 0 : i32
    %c0_i32_1 = arith.constant 0 : i32
    return %arg0, %c0_i32, %c0_i32_0 : i32, i32, i32
  }
  func.func @transform_1(%arg0: i32) -> (i32, i32, i32) {
    %c0_i32 = arith.constant 0 : i32
    %c0_i32_0 = arith.constant 0 : i32
    %c0_i32_1 = arith.constant 0 : i32
    %c0_i32_2 = arith.constant 0 : i32
    return %c0_i32, %c0_i32_0, %c0_i32_1 : i32, i32, i32
  }
  func.func @transform_2(%arg0: i32) -> (i32, i32) {
    %c0_i32 = arith.constant 0 : i32
    %c0_i32_0 = arith.constant 0 : i32
    %c0_i32_1 = arith.constant 0 : i32
    return %c0_i32, %c0_i32_0 : i32, i32
  }
  func.func @transform_3(%arg0: i32) -> (i32, i32) {
    %c0_i32 = arith.constant 0 : i32
    %c0_i32_0 = arith.constant 0 : i32
    %c0_i32_1 = arith.constant 0 : i32
    return %c0_i32, %c0_i32_0 : i32, i32
  }
  func.func @transform_4(%arg0: i32) -> (i32, i32) {
    %c0_i32 = arith.constant 0 : i32
    %c0_i32_0 = arith.constant 0 : i32
    %c0_i32_1 = arith.constant 0 : i32
    return %c0_i32, %c0_i32_0 : i32, i32
  }
  func.func @transform_5(%arg0: i32) -> (i32, i32, i32) {
    %c0_i32 = arith.constant 0 : i32
    %c0_i32_0 = arith.constant 0 : i32
    %c0_i32_1 = arith.constant 0 : i32
    return %arg0, %c0_i32, %c0_i32_0 : i32, i32, i32
  }
}

</mosaic_0001>

<llo_original>
// kernel: multitask_head_forward.1
$region0: #{multitask_head_forward.1}
  #allocation0 [shape = 'u32[]', space=smem, size = 0x4, offset = 0x4, fixed_abs, tag = 'smem constant byte address 0x4 - core index']
  #allocation1 [shape = 'u32[144,128]{1,0:T(1,128)}', space=vmem, size = 0x12000, scoped, tag = 'internal scratch']
  %s0 = inlined_call_operand.vmem [shape: f32[2,16,512], index: 0, kind: input, shape index: {}]
  %s1 = inlined_call_operand.vmem [shape: f32[9,16,16], index: 1, kind: input, shape index: {}]
  %s2 = inlined_call_operand.vmem [shape: f32[16,1], index: 2, kind: input, shape index: {}]
  %s3 = inlined_call_operand.vmem [shape: f32[8,16], index: 3, kind: input, shape index: {}]
  %s4 = inlined_call_operand.vmem [shape: f32[8,1], index: 4, kind: input, shape index: {}]
  %s5 = inlined_call_operand.vmem [shape: f32[2,8,384], index: 5, kind: output, shape index: {}]
  %s6 = sld [smem:[#allocation0]]
  $region53: #{multitask_head_forward.1} parent=0
    _
  %s8 = ssub.s32 1, %s6
  %s9 = scalar_select 0, %s8, %s6
  loop: start=0, step=1, limit=4
  $region2: #{multitask_head_forward.1} parent=0 // loop_pre_header
    _
  $region3: #{multitask_head_forward.1} parent=0 // loop_header
    %s11 = sphi 0, %s15
    %p12 = scmp.ge.s32.totalorder %s11, 4
    %s21 = sphi 0, %s23
    %s24 = sphi 0, %s21
    %s25 = sphi 0, %s24
    %s41 = sphi 0, %s25
    %s45 = sphi 0, %s45
    %s47 = sphi 0, %s45
    %s48 = sphi 0, %s47
    %s62 = sphi 0, %s48
    %s66 = sphi 0, %s66
    %s68 = sphi 0, %s66
    %s69 = sphi 0, %s68
    %s83 = sphi 0, %s69
    %s87 = sphi 0, %s87
    %s89 = sphi 0, %s87
    %s90 = sphi 0, %s89
    %s104 = sphi 0, %s90
    %s108 = sphi 0, %s108
    %s110 = sphi 0, %s108
    %s111 = sphi 0, %s110
    %s125 = sphi 0, %s111
    %s131 = sphi 0, %s133
    %s134 = sphi 0, %s131
    %s135 = sphi 0, %s134
    %s151 = sphi 0, %s135
  $region4: #{multitask_head_forward.1} parent=0 // loop_header_branch
    %14 = sbr.rel (%p12) target = $region8
  $region5: #{multitask_head_forward.1} parent=0 // loop_body
    %s16 = ssub.s32 %s11, 1
    %s17 = ssub.s32 %s11, 2
    %s18 = sadd.s32 %s11, 1
    %s19 = ssub.s32 %s11, %s18
    %p20 = scmp.eq.s32.totalorder %s19, 0
    %s22 = sadd.s32 %s21, 1
    %s23 = scalar_select %p20, %s21, %s22
    %p26 = pneg %p20
    %p27 = scmp.eq.s32.totalorder %s11, 1
    %p28 = por %p26, %p27
    %p29 = scmp.ne.s32.totalorder %s21, %s24
    %p30 = scmp.eq.s32.totalorder %s11, 0
    %p31 = por %p29, %p30
    %p32 = scmp.ne.s32.totalorder %s21, %s24
    %p33 = scmp.eq.s32.totalorder %s16, 1
    %p34 = por %p32, %p33
    %p35 = scmp.ne.s32.totalorder %s24, %s25
    %p36 = scmp.eq.s32.totalorder %s16, 0
    %p37 = por %p35, %p36
    %p38 = scmp.ne.s32.totalorder %s24, %s25
    %p39 = scmp.eq.s32.totalorder %s17, 1
    %p40 = por %p38, %p39
    %p42 = scmp.ne.s32.totalorder %s25, %s41
    %p43 = scmp.eq.s32.totalorder %s17, 0
    %p44 = por %p42, %p43
    %s46 = sadd.s32 %s45, 1
    %p49 = scmp.eq.s32.totalorder %s11, 1
    %p50 = scmp.ne.s32.totalorder %s45, %s47
    %p51 = scmp.eq.s32.totalorder %s11, 0
    %p52 = por %p50, %p51
    %p53 = scmp.ne.s32.totalorder %s45, %s47
    %p54 = scmp.eq.s32.totalorder %s16, 1
    %p55 = por %p53, %p54
    %p56 = scmp.ne.s32.totalorder %s47, %s48
    %p57 = scmp.eq.s32.totalorder %s16, 0
    %p58 = por %p56, %p57
    %p59 = scmp.ne.s32.totalorder %s47, %s48
    %p60 = scmp.eq.s32.totalorder %s17, 1
    %p61 = por %p59, %p60
    %p63 = scmp.ne.s32.totalorder %s48, %s62
    %p64 = scmp.eq.s32.totalorder %s17, 0
    %p65 = por %p63, %p64
    %s67 = sadd.s32 %s66, 1
    %p70 = scmp.eq.s32.totalorder %s11, 1
    %p71 = scmp.ne.s32.totalorder %s66, %s68
    %p72 = scmp.eq.s32.totalorder %s11, 0
    %p73 = por %p71, %p72
    %p74 = scmp.ne.s32.totalorder %s66, %s68
    %p75 = scmp.eq.s32.totalorder %s16, 1
    %p76 = por %p74, %p75
    %p77 = scmp.ne.s32.totalorder %s68, %s69
    %p78 = scmp.eq.s32.totalorder %s16, 0
    %p79 = por %p77, %p78
    %p80 = scmp.ne.s32.totalorder %s68, %s69
    %p81 = scmp.eq.s32.totalorder %s17, 1
    %p82 = por %p80, %p81
    %p84 = scmp.ne.s32.totalorder %s69, %s83
    %p85 = scmp.eq.s32.totalorder %s17, 0
    %p86 = por %p84, %p85
    %s88 = sadd.s32 %s87, 1
    %p91 = scmp.eq.s32.totalorder %s11, 1
    %p92 = scmp.ne.s32.totalorder %s87, %s89
    %p93 = scmp.eq.s32.totalorder %s11, 0
    %p94 = por %p92, %p93
    %p95 = scmp.ne.s32.totalorder %s87, %s89
    %p96 = scmp.eq.s32.totalorder %s16, 1
    %p97 = por %p95, %p96
    %p98 = scmp.ne.s32.totalorder %s89, %s90
    %p99 = scmp.eq.s32.totalorder %s16, 0
    %p100 = por %p98, %p99
    %p101 = scmp.ne.s32.totalorder %s89, %s90
    %p102 = scmp.eq.s32.totalorder %s17, 1
    %p103 = por %p101, %p102
    %p105 = scmp.ne.s32.totalorder %s90, %s104
    %p106 = scmp.eq.s32.totalorder %s17, 0
    %p107 = por %p105, %p106
    %s109 = sadd.s32 %s108, 1
    %p112 = scmp.eq.s32.totalorder %s11, 1
    %p113 = scmp.ne.s32.totalorder %s108, %s110
    %p114 = scmp.eq.s32.totalorder %s11, 0
    %p115 = por %p113, %p114
    %p116 = scmp.ne.s32.totalorder %s108, %s110
    %p117 = scmp.eq.s32.totalorder %s16, 1
    %p118 = por %p116, %p117
    %p119 = scmp.ne.s32.totalorder %s110, %s111
    %p120 = scmp.eq.s32.totalorder %s16, 0
    %p121 = por %p119, %p120
    %p122 = scmp.ne.s32.totalorder %s110, %s111
    %p123 = scmp.eq.s32.totalorder %s17, 1
    %p124 = por %p122, %p123
    %p126 = scmp.ne.s32.totalorder %s111, %s125
    %p127 = scmp.eq.s32.totalorder %s17, 0
    %p128 = por %p126, %p127
    %s129 = ssub.s32 %s11, %s18
    %p130 = scmp.eq.s32.totalorder %s129, 0
    %s132 = sadd.s32 %s131, 1
    %s133 = scalar_select %p130, %s131, %s132
    %p136 = pneg %p130
    %p137 = scmp.eq.s32.totalorder %s11, 1
    %p138 = por %p136, %p137
    %p139 = scmp.ne.s32.totalorder %s131, %s134
    %p140 = scmp.eq.s32.totalorder %s11, 0
    %p141 = por %p139, %p140
    %p142 = scmp.ne.s32.totalorder %s131, %s134
    %p143 = scmp.eq.s32.totalorder %s16, 1
    %p144 = por %p142, %p143
    %p145 = scmp.ne.s32.totalorder %s134, %s135
    %p146 = scmp.eq.s32.totalorder %s16, 0
    %p147 = por %p145, %p146
    %p148 = scmp.ne.s32.totalorder %s134, %s135
    %p149 = scmp.eq.s32.totalorder %s17, 1
    %p150 = por %p148, %p149
    %p152 = scmp.ne.s32.totalorder %s135, %s151
    %p153 = scmp.eq.s32.totalorder %s17, 0
    %p154 = por %p152, %p153
    %p155 = scmp.le.s32.totalorder 1, %s11
    %p156 = scmp.lt.s32.totalorder %s11, 3
    %p157 = pnand %p155, %p156
    %p158 = pneg %p157
    // Predicated region
    $region9: #{multitask_head_forward.1} parent=5 // pred_check
      _
    $region10: #{multitask_head_forward.1} parent=5 // pred_check_branch
      %160 = sbr.rel (%p157) target = $region12
    $region11: #{multitask_head_forward.1} parent=5 // pred_region
      %s161 = ssub.s32 %s11, 1
      // Predicated region
      $region13: #{multitask_head_forward.1} parent=11 // pred_check
        %p162 = pneg %p58
      $region14: #{multitask_head_forward.1} parent=11 // pred_check_branch
        %164 = sbr.rel (%p162) target = $region16
      $region15: #{multitask_head_forward.1} parent=11 // pred_region
        _
      $region16: #{multitask_head_forward.1} parent=11 // pred_fallthru
        _
      // Predicated region
      $region17: #{multitask_head_forward.1} parent=11 // pred_check
        %p165 = pneg %p79
      $region18: #{multitask_head_forward.1} parent=11 // pred_check_branch
        %167 = sbr.rel (%p165) target = $region20
      $region19: #{multitask_head_forward.1} parent=11 // pred_region
        _
      $region20: #{multitask_head_forward.1} parent=11 // pred_fallthru
        _
      // Predicated region
      $region21: #{multitask_head_forward.1} parent=11 // pred_check
        %p168 = pneg %p100
      $region22: #{multitask_head_forward.1} parent=11 // pred_check_branch
        %170 = sbr.rel (%p168) target = $region24
      $region23: #{multitask_head_forward.1} parent=11 // pred_region
        _
      $region24: #{multitask_head_forward.1} parent=11 // pred_fallthru
        _
      // Predicated region
      $region25: #{multitask_head_forward.1} parent=11 // pred_check
        %p171 = pneg %p121
      $region26: #{multitask_head_forward.1} parent=11 // pred_check_branch
        %173 = sbr.rel (%p171) target = $region28
      $region27: #{multitask_head_forward.1} parent=11 // pred_region
        _
      $region28: #{multitask_head_forward.1} parent=11 // pred_fallthru
        _
    $region12: #{multitask_head_forward.1} parent=5 // pred_fallthru
      _
    %p174 = scmp.lt.s32.totalorder %s11, 2
    // Predicated region
    $region29: #{multitask_head_forward.1} parent=5 // pred_check
      %p175 = pneg %p174
    $region30: #{multitask_head_forward.1} parent=5 // pred_check_branch
      %177 = sbr.rel (%p175) target = $region32
    $region31: #{multitask_head_forward.1} parent=5 // pred_region
      // Predicated region
      $region33: #{multitask_head_forward.1} parent=31 // pred_check
        %p178 = pneg %p31
      $region34: #{multitask_head_forward.1} parent=31 // pred_check_branch
        %180 = sbr.rel (%p178) target = $region36
      $region35: #{multitask_head_forward.1} parent=31 // pred_region
        %p181 = scmp.lt.s32.totalorder %s11, 1
        %s182 = scalar_select %p181, %s11, 1
        %s183 = smul.addr %s182, 8
        %s184 = smul.addr %s183, 8
        %s185 = scalar_lea.vmem %s0, %s184
      $region36: #{multitask_head_forward.1} parent=31 // pred_fallthru
        _
    $region32: #{multitask_head_forward.1} parent=5 // pred_fallthru
      _
    %p186 = scmp.le.s32.totalorder 1, %s11
    %p187 = scmp.lt.s32.totalorder %s11, 3
    %p188 = pnand %p186, %p187
    %p189 = pneg %p188
    // Predicated region
    $region37: #{multitask_head_forward.1} parent=5 // pred_check
      _
    $region38: #{multitask_head_forward.1} parent=5 // pred_check_branch
      %191 = sbr.rel (%p188) target = $region40
    $region39: #{multitask_head_forward.1} parent=5 // pred_region
      %s192 = ssub.s32 %s11, 1
      %p193 = scmp.lt.s32.totalorder %s16, 1
      %s194 = scalar_select %p193, %s16, 1
      %s195 = smul.addr %s194, 8
      %s196 = smul.addr %s195, 8
      %s197 = scalar_lea.vmem %s0, %s196
      %p198 = pneg %p37
      %p199 = pneg %p34
      %p200 = pneg %p58
      %p201 = pneg %p55
      %p202 = pneg %p79
      %p203 = pneg %p76
      %p204 = pneg %p100
      %p205 = pneg %p97
      %p206 = pneg %p121
      %p207 = pneg %p118
      %p208 = pneg %p147
      %p209 = pneg %p144
      %p210 = scmp.lt.s32.totalorder %s16, 1
      %s211 = scalar_select %p210, %s16, 1
      %s212 = smul.addr %s211, 3
      %s213 = smul.addr %s212, 8
      %s214 = scalar_lea.vmem %s5, %s213
      %p215 = scmp.lt.s32.totalorder %s16, 1
      %s216 = scalar_select %p215, %s16, 1
      %s217 = smul.addr %s216, 8
      %s218 = smul.addr %s217, 8
      %s219 = scalar_lea.vmem %s0, %s218
      %p220 = scmp.lt.s32.totalorder %s16, 1
      %s221 = scalar_select %p220, %s16, 1
      %s222 = smul.addr %s221, 3
      %s223 = smul.addr %s222, 8
      %s224 = scalar_lea.vmem %s5, %s223
      %v225 = vld [vmem:[%s1] sm:$0xff]
      %v226 = vld [vmem:[%s1 + $0x8] sm:$0xff]
      %v227 = vld [vmem:[%s219] sm:$0xff]
      %v228 = vld [vmem:[%s219 + $0x8] sm:$0xff]
      %v229 = vld [vmem:[%s219 + $0x10] sm:$0xff]
      %v230 = vld [vmem:[%s219 + $0x20] sm:$0xff]
      %v231 = vld [vmem:[%s219 + $0x28] sm:$0xff]
      %v232 = vld [vmem:[%s219 + $0x30] sm:$0xff]
      %s233 = scalar_lea.vmem %s1, 16
      %v234 = vld [vmem:[%s233] sm:$0xff]
      %v235 = vld [vmem:[%s233 + $0x8] sm:$0xff]
      %v236 = vld [vmem:[%s219] sm:$0xff]
      %v237 = vld [vmem:[%s219 + $0x8] sm:$0xff]
      %v238 = vld [vmem:[%s219 + $0x10] sm:$0xff]
      %v239 = vld [vmem:[%s219 + $0x18] sm:$0xff]
      %v240 = vld [vmem:[%s219 + $0x20] sm:$0xff]
      %v241 = vld [vmem:[%s219 + $0x28] sm:$0xff]
      %v242 = vld [vmem:[%s219 + $0x30] sm:$0xff]
      %v243 = vld [vmem:[%s219 + $0x38] sm:$0xff]
      %252 = vrot.lane.b32.xlu0 %v236, 127
      %v253 = vpop.permute.xlu0 %252
      %254 = vrot.lane.b32.xlu0 %v237, 127
      %v255 = vpop.permute.xlu0 %254
      %256 = vrot.lane.b32.xlu0 %v238, 127
      %v257 = vpop.permute.xlu0 %256
      %258 = vrot.lane.b32.xlu0 %v239, 127
      %v259 = vpop.permute.xlu0 %258
      %260 = vrot.lane.b32.xlu0 %v240, 127
      %v261 = vpop.permute.xlu0 %260
      %262 = vrot.lane.b32.xlu0 %v241, 127
      %v263 = vpop.permute.xlu0 %262
      %264 = vrot.lane.b32.xlu0 %v242, 127
      %v265 = vpop.permute.xlu0 %264
      %266 = vrot.lane.b32.xlu0 %v243, 127
      %v267 = vpop.permute.xlu0 %266
      %vm268 = vcmask 1039360
      %v269 = vsel %vm268, %v253, %v255
      %v270 = vsel %vm268, %v255, %v257
      %v271 = vsel %vm268, %v257, %v259
      %v272 = vsel %vm268, %v261, %v263
      %v273 = vsel %vm268, %v263, %v265
      %v274 = vsel %vm268, %v265, %v267
      %vm281 = vcmask 130048
      %v283 = vsel %vm281, %v234, 0
      %v286 = vsel %vm281, %v235, 0
      %288 = vmatprep.subr.mxu0 0.0
      %289 = vmatpush1.msra.mxu0 0.0
      %290 = vmatprep.subr.mxu0 0.0
      %291 = vmatpush1.msra.mxu0 0.0
      %292 = vmatprep.subr.mxu0 0.0
      %293 = vmatpush1.msra.mxu0 0.0
      %294 = vmatprep.subr.mxu0 0.0
      %295 = vmatpush1.msra.mxu0 0.0
      %296 = vmatprep.subr.mxu0 0.0
      %297 = vmatpush1.msra.mxu0 0.0
      %298 = vmatprep.subr.mxu0 0.0
      %299 = vmatpush1.msra.mxu0 0.0
      %300 = vmatprep.subr.mxu0 0.0
      %301 = vmatpush1.msra.mxu0 0.0
      %302 = vmatprep.subr.mxu0 0.0
      %303 = vmatpush1.msra.mxu0 0.0
      %304 = vmatprep.subr.mxu0 0.0
      %305 = vmatpush1.msra.mxu0 0.0
      %306 = vmatprep.subr.mxu0 0.0
      %307 = vmatpush1.msra.mxu0 0.0
      %308 = vmatprep.subr.mxu0 0.0
      %309 = vmatpush1.msra.mxu0 0.0
      %310 = vmatprep.subr.mxu0 0.0
      %311 = vmatpush1.msra.mxu0 0.0
      %312 = vmatprep.subr.mxu0 0.0
      %313 = vmatpush1.msra.mxu0 0.0
      %314 = vmatprep.subr.mxu0 0.0
      %315 = vmatpush1.msra.mxu0 0.0
      %316 = vmatprep.subr.mxu0 %v273
      %317 = vmatpush1.msra.mxu0 %v272
      %318 = vmatprep.subr.mxu0 %v270
      %319 = vmatpush1.msra.mxu0 %v269
      %320 = vmatprep.subr.mxu0 0.0
      %321 = vmatpush2.msra.mxu0 0.0
      %322 = vmatprep.subr.mxu0 0.0
      %323 = vmatpush2.msra.mxu0 0.0
      %324 = vmatprep.subr.mxu0 0.0
      %325 = vmatpush2.msra.mxu0 0.0
      %326 = vmatprep.subr.mxu0 0.0
      %327 = vmatpush2.msra.mxu0 0.0
      %328 = vmatprep.subr.mxu0 0.0
      %329 = vmatpush2.msra.mxu0 0.0
      %330 = vmatprep.subr.mxu0 0.0
      %331 = vmatpush2.msra.mxu0 0.0
      %332 = vmatprep.subr.mxu0 0.0
      %333 = vmatpush2.msra.mxu0 0.0
      %334 = vmatprep.subr.mxu0 0.0
      %335 = vmatpush2.msra.mxu0 0.0
      %336 = vmatprep.subr.mxu0 0.0
      %337 = vmatpush2.msra.mxu0 0.0
      %338 = vmatprep.subr.mxu0 0.0
      %339 = vmatpush2.msra.mxu0 0.0
      %340 = vmatprep.subr.mxu0 0.0
      %341 = vmatpush2.msra.mxu0 0.0
      %342 = vmatprep.subr.mxu0 0.0
      %343 = vmatpush2.msra.mxu0 0.0
      %344 = vmatprep.subr.mxu0 0.0
      %345 = vmatpush2.msra.mxu0 0.0
      %346 = vmatprep.subr.mxu0 0.0
      %347 = vmatpush2.msra.mxu0 0.0
      %348 = vmatprep.subr.mxu0 0.0
      %349 = vmatpush2.msra.mxu0 0.0
      %350 = vmatprep.subr.mxu0 0.0
      %351 = vmatpush2.msra.mxu0 0.0
      %352 = vmatprep.mubr.f32.mxu0 0.0
      %353 = vmatmul.mubr.f32.gmra.mxu0 %v283
      %v354 = vpop.f32.mrf.mxu0
      %v355 = vadd.f32 0.0, %v354
      %v356 = vpop.f32.mrf.mxu0
      %v357 = vadd.f32 0.0, %v356
      %358 = vmatprep.mubr.f32.mxu0 0.0
      %359 = vmatmul.mubr.f32.gmra.mxu0 %v286
      %v360 = vpop.f32.mrf.mxu0
      %v361 = vadd.f32 0.0, %v360
      %v362 = vpop.f32.mrf.mxu0
      %v363 = vadd.f32 0.0, %v362
      %364 = vdwg.mxu0
      %365 = vmatprep.subr.mxu0 0.0
      %366 = vmatpush1.msra.mxu0 0.0
      %367 = vmatprep.subr.mxu0 0.0
      %368 = vmatpush1.msra.mxu0 0.0
      %369 = vmatprep.subr.mxu0 0.0
      %370 = vmatpush1.msra.mxu0 0.0
      %371 = vmatprep.subr.mxu0 0.0
      %372 = vmatpush1.msra.mxu0 0.0
      %373 = vmatprep.subr.mxu0 0.0
      %374 = vmatpush1.msra.mxu0 0.0
      %375 = vmatprep.subr.mxu0 0.0
      %376 = vmatpush1.msra.mxu0 0.0
      %377 = vmatprep.subr.mxu0 0.0
      %378 = vmatpush1.msra.mxu0 0.0
      %379 = vmatprep.subr.mxu0 0.0
      %380 = vmatpush1.msra.mxu0 0.0
      %381 = vmatprep.subr.mxu0 0.0
      %382 = vmatpush1.msra.mxu0 0.0
      %383 = vmatprep.subr.mxu0 0.0
      %384 = vmatpush1.msra.mxu0 0.0
      %385 = vmatprep.subr.mxu0 0.0
      %386 = vmatpush1.msra.mxu0 0.0
      %387 = vmatprep.subr.mxu0 0.0
      %388 = vmatpush1.msra.mxu0 0.0
      %389 = vmatprep.subr.mxu0 0.0
      %390 = vmatpush1.msra.mxu0 0.0
      %391 = vmatprep.subr.mxu0 0.0
      %392 = vmatpush1.msra.mxu0 0.0
      %393 = vmatprep.subr.mxu0 0.0
      %394 = vmatpush1.msra.mxu0 %v274
      %395 = vmatprep.subr.mxu0 0.0
      %396 = vmatpush1.msra.mxu0 %v271
      %397 = vmatprep.subr.mxu0 0.0
      %398 = vmatpush2.msra.mxu0 0.0
      %399 = vmatprep.subr.mxu0 0.0
      %400 = vmatpush2.msra.mxu0 0.0
      %401 = vmatprep.subr.mxu0 0.0
      %402 = vmatpush2.msra.mxu0 0.0
      %403 = vmatprep.subr.mxu0 0.0
      %404 = vmatpush2.msra.mxu0 0.0
      %405 = vmatprep.subr.mxu0 0.0
      %406 = vmatpush2.msra.mxu0 0.0
      %407 = vmatprep.subr.mxu0 0.0
      %408 = vmatpush2.msra.mxu0 0.0
      %409 = vmatprep.subr.mxu0 0.0
      %410 = vmatpush2.msra.mxu0 0.0
      %411 = vmatprep.subr.mxu0 0.0
      %412 = vmatpush2.msra.mxu0 0.0
      %413 = vmatprep.subr.mxu0 0.0
      %414 = vmatpush2.msra.mxu0 0.0
      %415 = vmatprep.subr.mxu0 0.0
      %416 = vmatpush2.msra.mxu0 0.0
      %417 = vmatprep.subr.mxu0 0.0
      %418 = vmatpush2.msra.mxu0 0.0
      %419 = vmatprep.subr.mxu0 0.0
      %420 = vmatpush2.msra.mxu0 0.0
      %421 = vmatprep.subr.mxu0 0.0
      %422 = vmatpush2.msra.mxu0 0.0
      %423 = vmatprep.subr.mxu0 0.0
      %424 = vmatpush2.msra.mxu0 0.0
      %425 = vmatprep.subr.mxu0 0.0
      %426 = vmatpush2.msra.mxu0 0.0
      %427 = vmatprep.subr.mxu0 0.0
      %428 = vmatpush2.msra.mxu0 0.0
      %429 = vmatprep.mubr.f32.mxu0 0.0
      %430 = vmatmul.mubr.f32.gmra.mxu0 %v283
      %v431 = vpop.f32.mrf.mxu0
      %v432 = vadd.f32 0.0, %v431
      %v433 = vpop.f32.mrf.mxu0
      %434 = vmatprep.mubr.f32.mxu0 0.0
      %435 = vmatmul.mubr.f32.gmra.mxu0 %v286
      %v436 = vpop.f32.mrf.mxu0
      %v437 = vadd.f32 0.0, %v436
      %v438 = vpop.f32.mrf.mxu0
      %439 = vdwg.mxu0
      %v441 = vsel %vm281, %v225, 0
      %v444 = vsel %vm281, %v226, 0
      %446 = vmatprep.subr.mxu0 0.0
      %447 = vmatpush1.msra.mxu0 0.0
      %448 = vmatprep.subr.mxu0 0.0
      %449 = vmatpush1.msra.mxu0 0.0
      %450 = vmatprep.subr.mxu0 0.0
      %451 = vmatpush1.msra.mxu0 0.0
      %452 = vmatprep.subr.mxu0 0.0
      %453 = vmatpush1.msra.mxu0 0.0
      %454 = vmatprep.subr.mxu0 0.0
      %455 = vmatpush1.msra.mxu0 0.0
      %456 = vmatprep.subr.mxu0 0.0
      %457 = vmatpush1.msra.mxu0 0.0
      %458 = vmatprep.subr.mxu0 0.0
      %459 = vmatpush1.msra.mxu0 0.0
      %460 = vmatprep.subr.mxu0 0.0
      %461 = vmatpush1.msra.mxu0 0.0
      %462 = vmatprep.subr.mxu0 0.0
      %463 = vmatpush1.msra.mxu0 0.0
      %464 = vmatprep.subr.mxu0 0.0
      %465 = vmatpush1.msra.mxu0 0.0
      %466 = vmatprep.subr.mxu0 0.0
      %467 = vmatpush1.msra.mxu0 0.0
      %468 = vmatprep.subr.mxu0 0.0
      %469 = vmatpush1.msra.mxu0 0.0
      %470 = vmatprep.subr.mxu0 0.0
      %471 = vmatpush1.msra.mxu0 0.0
      %472 = vmatprep.subr.mxu0 0.0
      %473 = vmatpush1.msra.mxu0 0.0
      %474 = vmatprep.subr.mxu0 %v231
      %475 = vmatpush1.msra.mxu0 %v230
      %476 = vmatprep.subr.mxu0 %v228
      %477 = vmatpush1.msra.mxu0 %v227
      %478 = vmatprep.subr.mxu0 0.0
      %479 = vmatpush2.msra.mxu0 0.0
      %480 = vmatprep.subr.mxu0 0.0
      %481 = vmatpush2.msra.mxu0 0.0
      %482 = vmatprep.subr.mxu0 0.0
      %483 = vmatpush2.msra.mxu0 0.0
      %484 = vmatprep.subr.mxu0 0.0
      %485 = vmatpush2.msra.mxu0 0.0
      %486 = vmatprep.subr.mxu0 0.0
      %487 = vmatpush2.msra.mxu0 0.0
      %488 = vmatprep.subr.mxu0 0.0
      %489 = vmatpush2.msra.mxu0 0.0
      %490 = vmatprep.subr.mxu0 0.0
      %491 = vmatpush2.msra.mxu0 0.0
      %492 = vmatprep.subr.mxu0 0.0
      %493 = vmatpush2.msra.mxu0 0.0
      %494 = vmatprep.subr.mxu0 0.0
      %495 = vmatpush2.msra.mxu0 0.0
      %496 = vmatprep.subr.mxu0 0.0
      %497 = vmatpush2.msra.mxu0 0.0
      %498 = vmatprep.subr.mxu0 0.0
      %499 = vmatpush2.msra.mxu0 0.0
      %500 = vmatprep.subr.mxu0 0.0
      %501 = vmatpush2.msra.mxu0 0.0
      %502 = vmatprep.subr.mxu0 0.0
      %503 = vmatpush2.msra.mxu0 0.0
      %504 = vmatprep.subr.mxu0 0.0
      %505 = vmatpush2.msra.mxu0 0.0
      %506 = vmatprep.subr.mxu0 0.0
      %507 = vmatpush2.msra.mxu0 0.0
      %508 = vmatprep.subr.mxu0 0.0
      %509 = vmatpush2.msra.mxu0 0.0
      %510 = vmatprep.mubr.f32.mxu0 0.0
      %511 = vmatmul.mubr.f32.gmra.mxu0 %v441
      %v512 = vpop.f32.mrf.mxu0
      %v513 = vadd.f32 %v355, %v512
      %v514 = vpop.f32.mrf.mxu0
      %v515 = vadd.f32 %v357, %v514
      %516 = vmatprep.mubr.f32.mxu0 0.0
      %517 = vmatmul.mubr.f32.gmra.mxu0 %v444
      %v518 = vpop.f32.mrf.mxu0
      %v519 = vadd.f32 %v361, %v518
      %v520 = vpop.f32.mrf.mxu0
      %v521 = vadd.f32 %v363, %v520
      %522 = vdwg.mxu0
      %523 = vmatprep.subr.mxu0 0.0
      %524 = vmatpush1.msra.mxu0 0.0
      %525 = vmatprep.subr.mxu0 0.0
      %526 = vmatpush1.msra.mxu0 0.0
      %527 = vmatprep.subr.mxu0 0.0
      %528 = vmatpush1.msra.mxu0 0.0
      %529 = vmatprep.subr.mxu0 0.0
      %530 = vmatpush1.msra.mxu0 0.0
      %531 = vmatprep.subr.mxu0 0.0
      %532 = vmatpush1.msra.mxu0 0.0
      %533 = vmatprep.subr.mxu0 0.0
      %534 = vmatpush1.msra.mxu0 0.0
      %535 = vmatprep.subr.mxu0 0.0
      %536 = vmatpush1.msra.mxu0 0.0
      %537 = vmatprep.subr.mxu0 0.0
      %538 = vmatpush1.msra.mxu0 0.0
      %539 = vmatprep.subr.mxu0 0.0
      %540 = vmatpush1.msra.mxu0 0.0
      %541 = vmatprep.subr.mxu0 0.0
      %542 = vmatpush1.msra.mxu0 0.0
      %543 = vmatprep.subr.mxu0 0.0
      %544 = vmatpush1.msra.mxu0 0.0
      %545 = vmatprep.subr.mxu0 0.0
      %546 = vmatpush1.msra.mxu0 0.0
      %547 = vmatprep.subr.mxu0 0.0
      %548 = vmatpush1.msra.mxu0 0.0
      %549 = vmatprep.subr.mxu0 0.0
      %550 = vmatpush1.msra.mxu0 0.0
      %551 = vmatprep.subr.mxu0 0.0
      %552 = vmatpush1.msra.mxu0 %v232
      %553 = vmatprep.subr.mxu0 0.0
      %554 = vmatpush1.msra.mxu0 %v229
      %555 = vmatprep.subr.mxu0 0.0
      %556 = vmatpush2.msra.mxu0 0.0
      %557 = vmatprep.subr.mxu0 0.0
      %558 = vmatpush2.msra.mxu0 0.0
      %559 = vmatprep.subr.mxu0 0.0
      %560 = vmatpush2.msra.mxu0 0.0
      %561 = vmatprep.subr.mxu0 0.0
      %562 = vmatpush2.msra.mxu0 0.0
      %563 = vmatprep.subr.mxu0 0.0
      %564 = vmatpush2.msra.mxu0 0.0
      %565 = vmatprep.subr.mxu0 0.0
      %566 = vmatpush2.msra.mxu0 0.0
      %567 = vmatprep.subr.mxu0 0.0
      %568 = vmatpush2.msra.mxu0 0.0
      %569 = vmatprep.subr.mxu0 0.0
      %570 = vmatpush2.msra.mxu0 0.0
      %571 = vmatprep.subr.mxu0 0.0
      %572 = vmatpush2.msra.mxu0 0.0
      %573 = vmatprep.subr.mxu0 0.0
      %574 = vmatpush2.msra.mxu0 0.0
      %575 = vmatprep.subr.mxu0 0.0
      %576 = vmatpush2.msra.mxu0 0.0
      %577 = vmatprep.subr.mxu0 0.0
      %578 = vmatpush2.msra.mxu0 0.0
      %579 = vmatprep.subr.mxu0 0.0
      %580 = vmatpush2.msra.mxu0 0.0
      %581 = vmatprep.subr.mxu0 0.0
      %582 = vmatpush2.msra.mxu0 0.0
      %583 = vmatprep.subr.mxu0 0.0
      %584 = vmatpush2.msra.mxu0 0.0
      %585 = vmatprep.subr.mxu0 0.0
      %586 = vmatpush2.msra.mxu0 0.0
      %587 = vmatprep.mubr.f32.mxu0 0.0
      %588 = vmatmul.mubr.f32.gmra.mxu0 %v441
      %v589 = vpop.f32.mrf.mxu0
      %v590 = vadd.f32 %v432, %v589
      %v591 = vpop.f32.mrf.mxu0
      %592 = vmatprep.mubr.f32.mxu0 0.0
      %593 = vmatmul.mubr.f32.gmra.mxu0 %v444
      %v594 = vpop.f32.mrf.mxu0
      %v595 = vadd.f32 %v437, %v594
      %v596 = vpop.f32.mrf.mxu0
      %597 = vdwg.mxu0
      %s598 = scalar_lea.vmem %s1, 32
      %v599 = vld [vmem:[%s598] sm:$0xff]
      %v600 = vld [vmem:[%s598 + $0x8] sm:$0xff]
      %601 = vrot.lane.b32.xlu0 %v236, 126
      %v602 = vpop.permute.xlu0 %601
      %603 = vrot.lane.b32.xlu0 %v237, 126
      %v604 = vpop.permute.xlu0 %603
      %605 = vrot.lane.b32.xlu0 %v238, 126
      %v606 = vpop.permute.xlu0 %605
      %607 = vrot.lane.b32.xlu0 %v239, 126
      %v608 = vpop.permute.xlu0 %607
      %609 = vrot.lane.b32.xlu0 %v240, 126
      %v610 = vpop.permute.xlu0 %609
      %611 = vrot.lane.b32.xlu0 %v241, 126
      %v612 = vpop.permute.xlu0 %611
      %613 = vrot.lane.b32.xlu0 %v242, 126
      %v614 = vpop.permute.xlu0 %613
      %615 = vrot.lane.b32.xlu0 %v243, 126
      %v616 = vpop.permute.xlu0 %615
      %vm617 = vcmask 1031168
      %v618 = vsel %vm617, %v602, %v604
      %v619 = vsel %vm617, %v604, %v606
      %v620 = vsel %vm617, %v606, %v608
      %v621 = vsel %vm617, %v610, %v612
      %v622 = vsel %vm617, %v612, %v614
      %v623 = vsel %vm617, %v614, %v616
      %v631 = vsel %vm281, %v599, 0
      %v634 = vsel %vm281, %v600, 0
      %636 = vmatprep.subr.mxu0 0.0
      %637 = vmatpush1.msra.mxu0 0.0
      %638 = vmatprep.subr.mxu0 0.0
      %639 = vmatpush1.msra.mxu0 0.0
      %640 = vmatprep.subr.mxu0 0.0
      %641 = vmatpush1.msra.mxu0 0.0
      %642 = vmatprep.subr.mxu0 0.0
      %643 = vmatpush1.msra.mxu0 0.0
      %644 = vmatprep.subr.mxu0 0.0
      %645 = vmatpush1.msra.mxu0 0.0
      %646 = vmatprep.subr.mxu0 0.0
      %647 = vmatpush1.msra.mxu0 0.0
      %648 = vmatprep.subr.mxu0 0.0
      %649 = vmatpush1.msra.mxu0 0.0
      %650 = vmatprep.subr.mxu0 0.0
      %651 = vmatpush1.msra.mxu0 0.0
      %652 = vmatprep.subr.mxu0 0.0
      %653 = vmatpush1.msra.mxu0 0.0
      %654 = vmatprep.subr.mxu0 0.0
      %655 = vmatpush1.msra.mxu0 0.0
      %656 = vmatprep.subr.mxu0 0.0
      %657 = vmatpush1.msra.mxu0 0.0
      %658 = vmatprep.subr.mxu0 0.0
      %659 = vmatpush1.msra.mxu0 0.0
      %660 = vmatprep.subr.mxu0 0.0
      %661 = vmatpush1.msra.mxu0 0.0
      %662 = vmatprep.subr.mxu0 0.0
      %663 = vmatpush1.msra.mxu0 0.0
      %664 = vmatprep.subr.mxu0 %v622
      %665 = vmatpush1.msra.mxu0 %v621
      %666 = vmatprep.subr.mxu0 %v619
      %667 = vmatpush1.msra.mxu0 %v618
      %668 = vmatprep.subr.mxu0 0.0
      %669 = vmatpush2.msra.mxu0 0.0
      %670 = vmatprep.subr.mxu0 0.0
      %671 = vmatpush2.msra.mxu0 0.0
      %672 = vmatprep.subr.mxu0 0.0
      %673 = vmatpush2.msra.mxu0 0.0
      %674 = vmatprep.subr.mxu0 0.0
      %675 = vmatpush2.msra.mxu0 0.0
      %676 = vmatprep.subr.mxu0 0.0
      %677 = vmatpush2.msra.mxu0 0.0
      %678 = vmatprep.subr.mxu0 0.0
      %679 = vmatpush2.msra.mxu0 0.0
      %680 = vmatprep.subr.mxu0 0.0
      %681 = vmatpush2.msra.mxu0 0.0
      %682 = vmatprep.subr.mxu0 0.0
      %683 = vmatpush2.msra.mxu0 0.0
      %684 = vmatprep.subr.mxu0 0.0
      %685 = vmatpush2.msra.mxu0 0.0
      %686 = vmatprep.subr.mxu0 0.0
      %687 = vmatpush2.msra.mxu0 0.0
      %688 = vmatprep.subr.mxu0 0.0
      %689 = vmatpush2.msra.mxu0 0.0
      %690 = vmatprep.subr.mxu0 0.0
      %691 = vmatpush2.msra.mxu0 0.0
      %692 = vmatprep.subr.mxu0 0.0
      %693 = vmatpush2.msra.mxu0 0.0
      %694 = vmatprep.subr.mxu0 0.0
      %695 = vmatpush2.msra.mxu0 0.0
      %696 = vmatprep.subr.mxu0 0.0
      %697 = vmatpush2.msra.mxu0 0.0
      %698 = vmatprep.subr.mxu0 0.0
      %699 = vmatpush2.msra.mxu0 0.0
      %700 = vmatprep.mubr.f32.mxu0 0.0
      %701 = vmatmul.mubr.f32.gmra.mxu0 %v631
      %v702 = vpop.f32.mrf.mxu0
      %v703 = vadd.f32 0.0, %v702
      %v704 = vpop.f32.mrf.mxu0
      %v705 = vadd.f32 0.0, %v704
      %706 = vmatprep.mubr.f32.mxu0 0.0
      %707 = vmatmul.mubr.f32.gmra.mxu0 %v634
      %v708 = vpop.f32.mrf.mxu0
      %v709 = vadd.f32 0.0, %v708
      %v710 = vpop.f32.mrf.mxu0
      %v711 = vadd.f32 0.0, %v710
      %712 = vdwg.mxu0
      %713 = vmatprep.subr.mxu0 0.0
      %714 = vmatpush1.msra.mxu0 0.0
      %715 = vmatprep.subr.mxu0 0.0
      %716 = vmatpush1.msra.mxu0 0.0
      %717 = vmatprep.subr.mxu0 0.0
      %718 = vmatpush1.msra.mxu0 0.0
      %719 = vmatprep.subr.mxu0 0.0
      %720 = vmatpush1.msra.mxu0 0.0
      %721 = vmatprep.subr.mxu0 0.0
      %722 = vmatpush1.msra.mxu0 0.0
      %723 = vmatprep.subr.mxu0 0.0
      %724 = vmatpush1.msra.mxu0 0.0
      %725 = vmatprep.subr.mxu0 0.0
      %726 = vmatpush1.msra.mxu0 0.0
      %727 = vmatprep.subr.mxu0 0.0
      %728 = vmatpush1.msra.mxu0 0.0
      %729 = vmatprep.subr.mxu0 0.0
      %730 = vmatpush1.msra.mxu0 0.0
      %731 = vmatprep.subr.mxu0 0.0
      %732 = vmatpush1.msra.mxu0 0.0
      %733 = vmatprep.subr.mxu0 0.0
      %734 = vmatpush1.msra.mxu0 0.0
      %735 = vmatprep.subr.mxu0 0.0
      %736 = vmatpush1.msra.mxu0 0.0
      %737 = vmatprep.subr.mxu0 0.0
      %738 = vmatpush1.msra.mxu0 0.0
      %739 = vmatprep.subr.mxu0 0.0
      %740 = vmatpush1.msra.mxu0 0.0
      %741 = vmatprep.subr.mxu0 0.0
      %742 = vmatpush1.msra.mxu0 %v623
      %743 = vmatprep.subr.mxu0 0.0
      %744 = vmatpush1.msra.mxu0 %v620
      %745 = vmatprep.subr.mxu0 0.0
      %746 = vmatpush2.msra.mxu0 0.0
      %747 = vmatprep.subr.mxu0 0.0
      %748 = vmatpush2.msra.mxu0 0.0
      %749 = vmatprep.subr.mxu0 0.0
      %750 = vmatpush2.msra.mxu0 0.0
      %751 = vmatprep.subr.mxu0 0.0
      %752 = vmatpush2.msra.mxu0 0.0
      %753 = vmatprep.subr.mxu0 0.0
      %754 = vmatpush2.msra.mxu0 0.0
      %755 = vmatprep.subr.mxu0 0.0
      %756 = vmatpush2.msra.mxu0 0.0
      %757 = vmatprep.subr.mxu0 0.0
      %758 = vmatpush2.msra.mxu0 0.0
      %759 = vmatprep.subr.mxu0 0.0
      %760 = vmatpush2.msra.mxu0 0.0
      %761 = vmatprep.subr.mxu0 0.0
      %762 = vmatpush2.msra.mxu0 0.0
      %763 = vmatprep.subr.mxu0 0.0
      %764 = vmatpush2.msra.mxu0 0.0
      %765 = vmatprep.subr.mxu0 0.0
      %766 = vmatpush2.msra.mxu0 0.0
      %767 = vmatprep.subr.mxu0 0.0
      %768 = vmatpush2.msra.mxu0 0.0
      %769 = vmatprep.subr.mxu0 0.0
      %770 = vmatpush2.msra.mxu0 0.0
      %771 = vmatprep.subr.mxu0 0.0
      %772 = vmatpush2.msra.mxu0 0.0
      %773 = vmatprep.subr.mxu0 0.0
      %774 = vmatpush2.msra.mxu0 0.0
      %775 = vmatprep.subr.mxu0 0.0
      %776 = vmatpush2.msra.mxu0 0.0
      %777 = vmatprep.mubr.f32.mxu0 0.0
      %778 = vmatmul.mubr.f32.gmra.mxu0 %v631
      %v779 = vpop.f32.mrf.mxu0
      %v780 = vadd.f32 0.0, %v779
      %v781 = vpop.f32.mrf.mxu0
      %782 = vmatprep.mubr.f32.mxu0 0.0
      %783 = vmatmul.mubr.f32.gmra.mxu0 %v634
      %v784 = vpop.f32.mrf.mxu0
      %v785 = vadd.f32 0.0, %v784
      %v786 = vpop.f32.mrf.mxu0
      %787 = vdwg.mxu0
      %v788 = vadd.f32 %v513, %v703
      %v789 = vadd.f32 %v515, %v705
      %v790 = vadd.f32 %v590, %v780
      %v791 = vadd.f32 %v519, %v709
      %v792 = vadd.f32 %v521, %v711
      %v793 = vadd.f32 %v595, %v785
      %s794 = scalar_lea.vmem %s1, 48
      %v795 = vld [vmem:[%s794] sm:$0xff]
      %v796 = vld [vmem:[%s794 + $0x8] sm:$0xff]
      %797 = vrot.lane.b32.xlu0 %v236, 110
      %v798 = vpop.permute.xlu0 %797
      %799 = vrot.lane.b32.xlu0 %v237, 110
      %v800 = vpop.permute.xlu0 %799
      %801 = vrot.lane.b32.xlu0 %v238, 110
      %v802 = vpop.permute.xlu0 %801
      %803 = vrot.lane.b32.xlu0 %v239, 110
      %v804 = vpop.permute.xlu0 %803
      %805 = vrot.lane.b32.xlu0 %v240, 110
      %v806 = vpop.permute.xlu0 %805
      %807 = vrot.lane.b32.xlu0 %v241, 110
      %v808 = vpop.permute.xlu0 %807
      %809 = vrot.lane.b32.xlu0 %v242, 110
      %v810 = vpop.permute.xlu0 %809
      %811 = vrot.lane.b32.xlu0 %v243, 110
      %v812 = vpop.permute.xlu0 %811
      %vm813 = vcmask 900096
      %v814 = vsel %vm813, %v798, %v800
      %v815 = vsel %vm813, %v800, %v802
      %v816 = vsel %vm813, %v802, %v804
      %v817 = vsel %vm813, %v806, %v808
      %v818 = vsel %vm813, %v808, %v810
      %v819 = vsel %vm813, %v810, %v812
      %v827 = vsel %vm281, %v795, 0
      %v830 = vsel %vm281, %v796, 0
      %832 = vmatprep.subr.mxu0 0.0
      %833 = vmatpush1.msra.mxu0 0.0
      %834 = vmatprep.subr.mxu0 0.0
      %835 = vmatpush1.msra.mxu0 0.0
      %836 = vmatprep.subr.mxu0 0.0
      %837 = vmatpush1.msra.mxu0 0.0
      %838 = vmatprep.subr.mxu0 0.0
      %839 = vmatpush1.msra.mxu0 0.0
      %840 = vmatprep.subr.mxu0 0.0
      %841 = vmatpush1.msra.mxu0 0.0
      %842 = vmatprep.subr.mxu0 0.0
      %843 = vmatpush1.msra.mxu0 0.0
      %844 = vmatprep.subr.mxu0 0.0
      %845 = vmatpush1.msra.mxu0 0.0
      %846 = vmatprep.subr.mxu0 0.0
      %847 = vmatpush1.msra.mxu0 0.0
      %848 = vmatprep.subr.mxu0 0.0
      %849 = vmatpush1.msra.mxu0 0.0
      %850 = vmatprep.subr.mxu0 0.0
      %851 = vmatpush1.msra.mxu0 0.0
      %852 = vmatprep.subr.mxu0 0.0
      %853 = vmatpush1.msra.mxu0 0.0
      %854 = vmatprep.subr.mxu0 0.0
      %855 = vmatpush1.msra.mxu0 0.0
      %856 = vmatprep.subr.mxu0 0.0
      %857 = vmatpush1.msra.mxu0 0.0
      %858 = vmatprep.subr.mxu0 0.0
      %859 = vmatpush1.msra.mxu0 0.0
      %860 = vmatprep.subr.mxu0 %v818
      %861 = vmatpush1.msra.mxu0 %v817
      %862 = vmatprep.subr.mxu0 %v815
      %863 = vmatpush1.msra.mxu0 %v814
      %864 = vmatprep.subr.mxu0 0.0
      %865 = vmatpush2.msra.mxu0 0.0
      %866 = vmatprep.subr.mxu0 0.0
      %867 = vmatpush2.msra.mxu0 0.0
      %868 = vmatprep.subr.mxu0 0.0
      %869 = vmatpush2.msra.mxu0 0.0
      %870 = vmatprep.subr.mxu0 0.0
      %871 = vmatpush2.msra.mxu0 0.0
      %872 = vmatprep.subr.mxu0 0.0
      %873 = vmatpush2.msra.mxu0 0.0
      %874 = vmatprep.subr.mxu0 0.0
      %875 = vmatpush2.msra.mxu0 0.0
      %876 = vmatprep.subr.mxu0 0.0
      %877 = vmatpush2.msra.mxu0 0.0
      %878 = vmatprep.subr.mxu0 0.0
      %879 = vmatpush2.msra.mxu0 0.0
      %880 = vmatprep.subr.mxu0 0.0
      %881 = vmatpush2.msra.mxu0 0.0
      %882 = vmatprep.subr.mxu0 0.0
      %883 = vmatpush2.msra.mxu0 0.0
      %884 = vmatprep.subr.mxu0 0.0
      %885 = vmatpush2.msra.mxu0 0.0
      %886 = vmatprep.subr.mxu0 0.0
      %887 = vmatpush2.msra.mxu0 0.0
      %888 = vmatprep.subr.mxu0 0.0
      %889 = vmatpush2.msra.mxu0 0.0
      %890 = vmatprep.subr.mxu0 0.0
      %891 = vmatpush2.msra.mxu0 0.0
      %892 = vmatprep.subr.mxu0 0.0
      %893 = vmatpush2.msra.mxu0 0.0
      %894 = vmatprep.subr.mxu0 0.0
      %895 = vmatpush2.msra.mxu0 0.0
      %896 = vmatprep.mubr.f32.mxu0 0.0
      %897 = vmatmul.mubr.f32.gmra.mxu0 %v827
      %v898 = vpop.f32.mrf.mxu0
      %v899 = vadd.f32 0.0, %v898
      %v900 = vpop.f32.mrf.mxu0
      %v901 = vadd.f32 0.0, %v900
      %902 = vmatprep.mubr.f32.mxu0 0.0
      %903 = vmatmul.mubr.f32.gmra.mxu0 %v830
      %v904 = vpop.f32.mrf.mxu0
      %v905 = vadd.f32 0.0, %v904
      %v906 = vpop.f32.mrf.mxu0
      %v907 = vadd.f32 0.0, %v906
      %908 = vdwg.mxu0
      %909 = vmatprep.subr.mxu0 0.0
      %910 = vmatpush1.msra.mxu0 0.0
      %911 = vmatprep.subr.mxu0 0.0
      %912 = vmatpush1.msra.mxu0 0.0
      %913 = vmatprep.subr.mxu0 0.0
      %914 = vmatpush1.msra.mxu0 0.0
      %915 = vmatprep.subr.mxu0 0.0
      %916 = vmatpush1.msra.mxu0 0.0
      %917 = vmatprep.subr.mxu0 0.0
      %918 = vmatpush1.msra.mxu0 0.0
      %919 = vmatprep.subr.mxu0 0.0
      %920 = vmatpush1.msra.mxu0 0.0
      %921 = vmatprep.subr.mxu0 0.0
      %922 = vmatpush1.msra.mxu0 0.0
      %923 = vmatprep.subr.mxu0 0.0
      %924 = vmatpush1.msra.mxu0 0.0
      %925 = vmatprep.subr.mxu0 0.0
      %926 = vmatpush1.msra.mxu0 0.0
      %927 = vmatprep.subr.mxu0 0.0
      %928 = vmatpush1.msra.mxu0 0.0
      %929 = vmatprep.subr.mxu0 0.0
      %930 = vmatpush1.msra.mxu0 0.0
      %931 = vmatprep.subr.mxu0 0.0
      %932 = vmatpush1.msra.mxu0 0.0
      %933 = vmatprep.subr.mxu0 0.0
      %934 = vmatpush1.msra.mxu0 0.0
      %935 = vmatprep.subr.mxu0 0.0
      %936 = vmatpush1.msra.mxu0 0.0
      %937 = vmatprep.subr.mxu0 0.0
      %938 = vmatpush1.msra.mxu0 %v819
      %939 = vmatprep.subr.mxu0 0.0
      %940 = vmatpush1.msra.mxu0 %v816
      %941 = vmatprep.subr.mxu0 0.0
      %942 = vmatpush2.msra.mxu0 0.0
      %943 = vmatprep.subr.mxu0 0.0
      %944 = vmatpush2.msra.mxu0 0.0
      %945 = vmatprep.subr.mxu0 0.0
      %946 = vmatpush2.msra.mxu0 0.0
      %947 = vmatprep.subr.mxu0 0.0
      %948 = vmatpush2.msra.mxu0 0.0
      %949 = vmatprep.subr.mxu0 0.0
      %950 = vmatpush2.msra.mxu0 0.0
      %951 = vmatprep.subr.mxu0 0.0
      %952 = vmatpush2.msra.mxu0 0.0
      %953 = vmatprep.subr.mxu0 0.0
      %954 = vmatpush2.msra.mxu0 0.0
      %955 = vmatprep.subr.mxu0 0.0
      %956 = vmatpush2.msra.mxu0 0.0
      %957 = vmatprep.subr.mxu0 0.0
      %958 = vmatpush2.msra.mxu0 0.0
      %959 = vmatprep.subr.mxu0 0.0
      %960 = vmatpush2.msra.mxu0 0.0
      %961 = vmatprep.subr.mxu0 0.0
      %962 = vmatpush2.msra.mxu0 0.0
      %963 = vmatprep.subr.mxu0 0.0
      %964 = vmatpush2.msra.mxu0 0.0
      %965 = vmatprep.subr.mxu0 0.0
      %966 = vmatpush2.msra.mxu0 0.0
      %967 = vmatprep.subr.mxu0 0.0
      %968 = vmatpush2.msra.mxu0 0.0
      %969 = vmatprep.subr.mxu0 0.0
      %970 = vmatpush2.msra.mxu0 0.0
      %971 = vmatprep.subr.mxu0 0.0
      %972 = vmatpush2.msra.mxu0 0.0
      %973 = vmatprep.mubr.f32.mxu0 0.0
      %974 = vmatmul.mubr.f32.gmra.mxu0 %v827
      %v975 = vpop.f32.mrf.mxu0
      %v976 = vadd.f32 0.0, %v975
      %v977 = vpop.f32.mrf.mxu0
      %978 = vmatprep.mubr.f32.mxu0 0.0
      %979 = vmatmul.mubr.f32.gmra.mxu0 %v830
      %v980 = vpop.f32.mrf.mxu0
      %v981 = vadd.f32 0.0, %v980
      %v982 = vpop.f32.mrf.mxu0
      %983 = vdwg.mxu0
      %v984 = vadd.f32 %v788, %v899
      %v985 = vadd.f32 %v789, %v901
      %v986 = vadd.f32 %v790, %v976
      %v987 = vadd.f32 %v791, %v905
      %v988 = vadd.f32 %v792, %v907
      %v989 = vadd.f32 %v793, %v981
      %s990 = scalar_lea.vmem %s1, 64
      %v991 = vld [vmem:[%s990] sm:$0xff]
      %v992 = vld [vmem:[%s990 + $0x8] sm:$0xff]
      %993 = vrot.lane.b32.xlu0 %v236, 109
      %v994 = vpop.permute.xlu0 %993
      %995 = vrot.lane.b32.xlu0 %v237, 109
      %v996 = vpop.permute.xlu0 %995
      %997 = vrot.lane.b32.xlu0 %v238, 109
      %v998 = vpop.permute.xlu0 %997
      %999 = vrot.lane.b32.xlu0 %v239, 109
      %v1000 = vpop.permute.xlu0 %999
      %1001 = vrot.lane.b32.xlu0 %v240, 109
      %v1002 = vpop.permute.xlu0 %1001
      %1003 = vrot.lane.b32.xlu0 %v241, 109
      %v1004 = vpop.permute.xlu0 %1003
      %1005 = vrot.lane.b32.xlu0 %v242, 109
      %v1006 = vpop.permute.xlu0 %1005
      %1007 = vrot.lane.b32.xlu0 %v243, 109
      %v1008 = vpop.permute.xlu0 %1007
      %vm1009 = vcmask 891904
      %v1010 = vsel %vm1009, %v994, %v996
      %v1011 = vsel %vm1009, %v996, %v998
      %v1012 = vsel %vm1009, %v998, %v1000
      %v1013 = vsel %vm1009, %v1002, %v1004
      %v1014 = vsel %vm1009, %v1004, %v1006
      %v1015 = vsel %vm1009, %v1006, %v1008
      %v1023 = vsel %vm281, %v991, 0
      %v1026 = vsel %vm281, %v992, 0
      %1028 = vmatprep.subr.mxu0 0.0
      %1029 = vmatpush1.msra.mxu0 0.0
      %1030 = vmatprep.subr.mxu0 0.0
      %1031 = vmatpush1.msra.mxu0 0.0
      %1032 = vmatprep.subr.mxu0 0.0
      %1033 = vmatpush1.msra.mxu0 0.0
      %1034 = vmatprep.subr.mxu0 0.0
      %1035 = vmatpush1.msra.mxu0 0.0
      %1036 = vmatprep.subr.mxu0 0.0
      %1037 = vmatpush1.msra.mxu0 0.0
      %1038 = vmatprep.subr.mxu0 0.0
      %1039 = vmatpush1.msra.mxu0 0.0
      %1040 = vmatprep.subr.mxu0 0.0
      %1041 = vmatpush1.msra.mxu0 0.0
      %1042 = vmatprep.subr.mxu0 0.0
      %1043 = vmatpush1.msra.mxu0 0.0
      %1044 = vmatprep.subr.mxu0 0.0
      %1045 = vmatpush1.msra.mxu0 0.0
      %1046 = vmatprep.subr.mxu0 0.0
      %1047 = vmatpush1.msra.mxu0 0.0
      %1048 = vmatprep.subr.mxu0 0.0
      %1049 = vmatpush1.msra.mxu0 0.0
      %1050 = vmatprep.subr.mxu0 0.0
      %1051 = vmatpush1.msra.mxu0 0.0
      %1052 = vmatprep.subr.mxu0 0.0
      %1053 = vmatpush1.msra.mxu0 0.0
      %1054 = vmatprep.subr.mxu0 0.0
      %1055 = vmatpush1.msra.mxu0 0.0
      %1056 = vmatprep.subr.mxu0 %v1014
      %1057 = vmatpush1.msra.mxu0 %v1013
      %1058 = vmatprep.subr.mxu0 %v1011
      %1059 = vmatpush1.msra.mxu0 %v1010
      %1060 = vmatprep.subr.mxu0 0.0
      %1061 = vmatpush2.msra.mxu0 0.0
      %1062 = vmatprep.subr.mxu0 0.0
      %1063 = vmatpush2.msra.mxu0 0.0
      %1064 = vmatprep.subr.mxu0 0.0
      %1065 = vmatpush2.msra.mxu0 0.0
      %1066 = vmatprep.subr.mxu0 0.0
      %1067 = vmatpush2.msra.mxu0 0.0
      %1068 = vmatprep.subr.mxu0 0.0
      %1069 = vmatpush2.msra.mxu0 0.0
      %1070 = vmatprep.subr.mxu0 0.0
      %1071 = vmatpush2.msra.mxu0 0.0
      %1072 = vmatprep.subr.mxu0 0.0
      %1073 = vmatpush2.msra.mxu0 0.0
      %1074 = vmatprep.subr.mxu0 0.0
      %1075 = vmatpush2.msra.mxu0 0.0
      %1076 = vmatprep.subr.mxu0 0.0
      %1077 = vmatpush2.msra.mxu0 0.0
      %1078 = vmatprep.subr.mxu0 0.0
      %1079 = vmatpush2.msra.mxu0 0.0
      %1080 = vmatprep.subr.mxu0 0.0
      %1081 = vmatpush2.msra.mxu0 0.0
      %1082 = vmatprep.subr.mxu0 0.0
      %1083 = vmatpush2.msra.mxu0 0.0
      %1084 = vmatprep.subr.mxu0 0.0
      %1085 = vmatpush2.msra.mxu0 0.0
      %1086 = vmatprep.subr.mxu0 0.0
      %1087 = vmatpush2.msra.mxu0 0.0
      %1088 = vmatprep.subr.mxu0 0.0
      %1089 = vmatpush2.msra.mxu0 0.0
      %1090 = vmatprep.subr.mxu0 0.0
      %1091 = vmatpush2.msra.mxu0 0.0
      %1092 = vmatprep.mubr.f32.mxu0 0.0
      %1093 = vmatmul.mubr.f32.gmra.mxu0 %v1023
      %v1094 = vpop.f32.mrf.mxu0
      %v1095 = vadd.f32 0.0, %v1094
      %v1096 = vpop.f32.mrf.mxu0
      %v1097 = vadd.f32 0.0, %v1096
      %1098 = vmatprep.mubr.f32.mxu0 0.0
      %1099 = vmatmul.mubr.f32.gmra.mxu0 %v1026
      %v1100 = vpop.f32.mrf.mxu0
      %v1101 = vadd.f32 0.0, %v1100
      %v1102 = vpop.f32.mrf.mxu0
      %v1103 = vadd.f32 0.0, %v1102
      %1104 = vdwg.mxu0
      %1105 = vmatprep.subr.mxu0 0.0
      %1106 = vmatpush1.msra.mxu0 0.0
      %1107 = vmatprep.subr.mxu0 0.0
      %1108 = vmatpush1.msra.mxu0 0.0
      %1109 = vmatprep.subr.mxu0 0.0
      %1110 = vmatpush1.msra.mxu0 0.0
      %1111 = vmatprep.subr.mxu0 0.0
      %1112 = vmatpush1.msra.mxu0 0.0
      %1113 = vmatprep.subr.mxu0 0.0
      %1114 = vmatpush1.msra.mxu0 0.0
      %1115 = vmatprep.subr.mxu0 0.0
      %1116 = vmatpush1.msra.mxu0 0.0
      %1117 = vmatprep.subr.mxu0 0.0
      %1118 = vmatpush1.msra.mxu0 0.0
      %1119 = vmatprep.subr.mxu0 0.0
      %1120 = vmatpush1.msra.mxu0 0.0
      %1121 = vmatprep.subr.mxu0 0.0
      %1122 = vmatpush1.msra.mxu0 0.0
      %1123 = vmatprep.subr.mxu0 0.0
      %1124 = vmatpush1.msra.mxu0 0.0
      %1125 = vmatprep.subr.mxu0 0.0
      %1126 = vmatpush1.msra.mxu0 0.0
      %1127 = vmatprep.subr.mxu0 0.0
      %1128 = vmatpush1.msra.mxu0 0.0
      %1129 = vmatprep.subr.mxu0 0.0
      %1130 = vmatpush1.msra.mxu0 0.0
      %1131 = vmatprep.subr.mxu0 0.0
      %1132 = vmatpush1.msra.mxu0 0.0
      %1133 = vmatprep.subr.mxu0 0.0
      %1134 = vmatpush1.msra.mxu0 %v1015
      %1135 = vmatprep.subr.mxu0 0.0
      %1136 = vmatpush1.msra.mxu0 %v1012
      %1137 = vmatprep.subr.mxu0 0.0
      %1138 = vmatpush2.msra.mxu0 0.0
      %1139 = vmatprep.subr.mxu0 0.0
      %1140 = vmatpush2.msra.mxu0 0.0
      %1141 = vmatprep.subr.mxu0 0.0
      %1142 = vmatpush2.msra.mxu0 0.0
      %1143 = vmatprep.subr.mxu0 0.0
      %1144 = vmatpush2.msra.mxu0 0.0
      %1145 = vmatprep.subr.mxu0 0.0
      %1146 = vmatpush2.msra.mxu0 0.0
      %1147 = vmatprep.subr.mxu0 0.0
      %1148 = vmatpush2.msra.mxu0 0.0
      %1149 = vmatprep.subr.mxu0 0.0
      %1150 = vmatpush2.msra.mxu0 0.0
      %1151 = vmatprep.subr.mxu0 0.0
      %1152 = vmatpush2.msra.mxu0 0.0
      %1153 = vmatprep.subr.mxu0 0.0
      %1154 = vmatpush2.msra.mxu0 0.0
      %1155 = vmatprep.subr.mxu0 0.0
      %1156 = vmatpush2.msra.mxu0 0.0
      %1157 = vmatprep.subr.mxu0 0.0
      %1158 = vmatpush2.msra.mxu0 0.0
      %1159 = vmatprep.subr.mxu0 0.0
      %1160 = vmatpush2.msra.mxu0 0.0
      %1161 = vmatprep.subr.mxu0 0.0
      %1162 = vmatpush2.msra.mxu0 0.0
      %1163 = vmatprep.subr.mxu0 0.0
      %1164 = vmatpush2.msra.mxu0 0.0
      %1165 = vmatprep.subr.mxu0 0.0
      %1166 = vmatpush2.msra.mxu0 0.0
      %1167 = vmatprep.subr.mxu0 0.0
      %1168 = vmatpush2.msra.mxu0 0.0
      %1169 = vmatprep.mubr.f32.mxu0 0.0
      %1170 = vmatmul.mubr.f32.gmra.mxu0 %v1023
      %v1171 = vpop.f32.mrf.mxu0
      %v1172 = vadd.f32 0.0, %v1171
      %v1173 = vpop.f32.mrf.mxu0
      %1174 = vmatprep.mubr.f32.mxu0 0.0
      %1175 = vmatmul.mubr.f32.gmra.mxu0 %v1026
      %v1176 = vpop.f32.mrf.mxu0
      %v1177 = vadd.f32 0.0, %v1176
      %v1178 = vpop.f32.mrf.mxu0
      %1179 = vdwg.mxu0
      %v1180 = vadd.f32 %v984, %v1095
      %v1181 = vadd.f32 %v985, %v1097
      %v1182 = vadd.f32 %v986, %v1172
      %v1183 = vadd.f32 %v987, %v1101
      %v1184 = vadd.f32 %v988, %v1103
      %v1185 = vadd.f32 %v989, %v1177
      %s1186 = scalar_lea.vmem %s1, 80
      %v1187 = vld [vmem:[%s1186] sm:$0xff]
      %v1188 = vld [vmem:[%s1186 + $0x8] sm:$0xff]
      %1189 = vrot.lane.b32.xlu0 %v236, 108
      %v1190 = vpop.permute.xlu0 %1189
      %1191 = vrot.lane.b32.xlu0 %v237, 108
      %v1192 = vpop.permute.xlu0 %1191
      %1193 = vrot.lane.b32.xlu0 %v238, 108
      %v1194 = vpop.permute.xlu0 %1193
      %1195 = vrot.lane.b32.xlu0 %v239, 108
      %v1196 = vpop.permute.xlu0 %1195
      %1197 = vrot.lane.b32.xlu0 %v240, 108
      %v1198 = vpop.permute.xlu0 %1197
      %1199 = vrot.lane.b32.xlu0 %v241, 108
      %v1200 = vpop.permute.xlu0 %1199
      %1201 = vrot.lane.b32.xlu0 %v242, 108
      %v1202 = vpop.permute.xlu0 %1201
      %1203 = vrot.lane.b32.xlu0 %v243, 108
      %v1204 = vpop.permute.xlu0 %1203
      %vm1205 = vcmask 883712
      %v1206 = vsel %vm1205, %v1190, %v1192
      %v1207 = vsel %vm1205, %v1192, %v1194
      %v1208 = vsel %vm1205, %v1194, %v1196
      %v1209 = vsel %vm1205, %v1198, %v1200
      %v1210 = vsel %vm1205, %v1200, %v1202
      %v1211 = vsel %vm1205, %v1202, %v1204
      %v1219 = vsel %vm281, %v1187, 0
      %v1222 = vsel %vm281, %v1188, 0
      %1224 = vmatprep.subr.mxu0 0.0
      %1225 = vmatpush1.msra.mxu0 0.0
      %1226 = vmatprep.subr.mxu0 0.0
      %1227 = vmatpush1.msra.mxu0 0.0
      %1228 = vmatprep.subr.mxu0 0.0
      %1229 = vmatpush1.msra.mxu0 0.0
      %1230 = vmatprep.subr.mxu0 0.0
      %1231 = vmatpush1.msra.mxu0 0.0
      %1232 = vmatprep.subr.mxu0 0.0
      %1233 = vmatpush1.msra.mxu0 0.0
      %1234 = vmatprep.subr.mxu0 0.0
      %1235 = vmatpush1.msra.mxu0 0.0
      %1236 = vmatprep.subr.mxu0 0.0
      %1237 = vmatpush1.msra.mxu0 0.0
      %1238 = vmatprep.subr.mxu0 0.0
      %1239 = vmatpush1.msra.mxu0 0.0
      %1240 = vmatprep.subr.mxu0 0.0
      %1241 = vmatpush1.msra.mxu0 0.0
      %1242 = vmatprep.subr.mxu0 0.0
      %1243 = vmatpush1.msra.mxu0 0.0
      %1244 = vmatprep.subr.mxu0 0.0
      %1245 = vmatpush1.msra.mxu0 0.0
      %1246 = vmatprep.subr.mxu0 0.0
      %1247 = vmatpush1.msra.mxu0 0.0
      %1248 = vmatprep.subr.mxu0 0.0
      %1249 = vmatpush1.msra.mxu0 0.0
      %1250 = vmatprep.subr.mxu0 0.0
      %1251 = vmatpush1.msra.mxu0 0.0
      %1252 = vmatprep.subr.mxu0 %v1210
      %1253 = vmatpush1.msra.mxu0 %v1209
      %1254 = vmatprep.subr.mxu0 %v1207
      %1255 = vmatpush1.msra.mxu0 %v1206
      %1256 = vmatprep.subr.mxu0 0.0
      %1257 = vmatpush2.msra.mxu0 0.0
      %1258 = vmatprep.subr.mxu0 0.0
      %1259 = vmatpush2.msra.mxu0 0.0
      %1260 = vmatprep.subr.mxu0 0.0
      %1261 = vmatpush2.msra.mxu0 0.0
      %1262 = vmatprep.subr.mxu0 0.0
      %1263 = vmatpush2.msra.mxu0 0.0
      %1264 = vmatprep.subr.mxu0 0.0
      %1265 = vmatpush2.msra.mxu0 0.0
      %1266 = vmatprep.subr.mxu0 0.0
      %1267 = vmatpush2.msra.mxu0 0.0
      %1268 = vmatprep.subr.mxu0 0.0
      %1269 = vmatpush2.msra.mxu0 0.0
      %1270 = vmatprep.subr.mxu0 0.0
      %1271 = vmatpush2.msra.mxu0 0.0
      %1272 = vmatprep.subr.mxu0 0.0
      %1273 = vmatpush2.msra.mxu0 0.0
      %1274 = vmatprep.subr.mxu0 0.0
      %1275 = vmatpush2.msra.mxu0 0.0
      %1276 = vmatprep.subr.mxu0 0.0
      %1277 = vmatpush2.msra.mxu0 0.0
      %1278 = vmatprep.subr.mxu0 0.0
      %1279 = vmatpush2.msra.mxu0 0.0
      %1280 = vmatprep.subr.mxu0 0.0
      %1281 = vmatpush2.msra.mxu0 0.0
      %1282 = vmatprep.subr.mxu0 0.0
      %1283 = vmatpush2.msra.mxu0 0.0
      %1284 = vmatprep.subr.mxu0 0.0
      %1285 = vmatpush2.msra.mxu0 0.0
      %1286 = vmatprep.subr.mxu0 0.0
      %1287 = vmatpush2.msra.mxu0 0.0
      %1288 = vmatprep.mubr.f32.mxu0 0.0
      %1289 = vmatmul.mubr.f32.gmra.mxu0 %v1219
      %v1290 = vpop.f32.mrf.mxu0
      %v1291 = vadd.f32 0.0, %v1290
      %v1292 = vpop.f32.mrf.mxu0
      %v1293 = vadd.f32 0.0, %v1292
      %1294 = vmatprep.mubr.f32.mxu0 0.0
      %1295 = vmatmul.mubr.f32.gmra.mxu0 %v1222
      %v1296 = vpop.f32.mrf.mxu0
      %v1297 = vadd.f32 0.0, %v1296
      %v1298 = vpop.f32.mrf.mxu0
      %v1299 = vadd.f32 0.0, %v1298
      %1300 = vdwg.mxu0
      %1301 = vmatprep.subr.mxu0 0.0
      %1302 = vmatpush1.msra.mxu0 0.0
      %1303 = vmatprep.subr.mxu0 0.0
      %1304 = vmatpush1.msra.mxu0 0.0
      %1305 = vmatprep.subr.mxu0 0.0
      %1306 = vmatpush1.msra.mxu0 0.0
      %1307 = vmatprep.subr.mxu0 0.0
      %1308 = vmatpush1.msra.mxu0 0.0
      %1309 = vmatprep.subr.mxu0 0.0
      %1310 = vmatpush1.msra.mxu0 0.0
      %1311 = vmatprep.subr.mxu0 0.0
      %1312 = vmatpush1.msra.mxu0 0.0
      %1313 = vmatprep.subr.mxu0 0.0
      %1314 = vmatpush1.msra.mxu0 0.0
      %1315 = vmatprep.subr.mxu0 0.0
      %1316 = vmatpush1.msra.mxu0 0.0
      %1317 = vmatprep.subr.mxu0 0.0
      %1318 = vmatpush1.msra.mxu0 0.0
      %1319 = vmatprep.subr.mxu0 0.0
      %1320 = vmatpush1.msra.mxu0 0.0
      %1321 = vmatprep.subr.mxu0 0.0
      %1322 = vmatpush1.msra.mxu0 0.0
      %1323 = vmatprep.subr.mxu0 0.0
      %1324 = vmatpush1.msra.mxu0 0.0
      %1325 = vmatprep.subr.mxu0 0.0
      %1326 = vmatpush1.msra.mxu0 0.0
      %1327 = vmatprep.subr.mxu0 0.0
      %1328 = vmatpush1.msra.mxu0 0.0
      %1329 = vmatprep.subr.mxu0 0.0
      %1330 = vmatpush1.msra.mxu0 %v1211
      %1331 = vmatprep.subr.mxu0 0.0
      %1332 = vmatpush1.msra.mxu0 %v1208
      %1333 = vmatprep.subr.mxu0 0.0
      %1334 = vmatpush2.msra.mxu0 0.0
      %1335 = vmatprep.subr.mxu0 0.0
      %1336 = vmatpush2.msra.mxu0 0.0
      %1337 = vmatprep.subr.mxu0 0.0
      %1338 = vmatpush2.msra.mxu0 0.0
      %1339 = vmatprep.subr.mxu0 0.0
      %1340 = vmatpush2.msra.mxu0 0.0
      %1341 = vmatprep.subr.mxu0 0.0
      %1342 = vmatpush2.msra.mxu0 0.0
      %1343 = vmatprep.subr.mxu0 0.0
      %1344 = vmatpush2.msra.mxu0 0.0
      %1345 = vmatprep.subr.mxu0 0.0
      %1346 = vmatpush2.msra.mxu0 0.0
      %1347 = vmatprep.subr.mxu0 0.0
      %1348 = vmatpush2.msra.mxu0 0.0
      %1349 = vmatprep.subr.mxu0 0.0
      %1350 = vmatpush2.msra.mxu0 0.0
      %1351 = vmatprep.subr.mxu0 0.0
      %1352 = vmatpush2.msra.mxu0 0.0
      %1353 = vmatprep.subr.mxu0 0.0
      %1354 = vmatpush2.msra.mxu0 0.0
      %1355 = vmatprep.subr.mxu0 0.0
      %1356 = vmatpush2.msra.mxu0 0.0
      %1357 = vmatprep.subr.mxu0 0.0
      %1358 = vmatpush2.msra.mxu0 0.0
      %1359 = vmatprep.subr.mxu0 0.0
      %1360 = vmatpush2.msra.mxu0 0.0
      %1361 = vmatprep.subr.mxu0 0.0
      %1362 = vmatpush2.msra.mxu0 0.0
      %1363 = vmatprep.subr.mxu0 0.0
      %1364 = vmatpush2.msra.mxu0 0.0
      %1365 = vmatprep.mubr.f32.mxu0 0.0
      %1366 = vmatmul.mubr.f32.gmra.mxu0 %v1219
      %v1367 = vpop.f32.mrf.mxu0
      %v1368 = vadd.f32 0.0, %v1367
      %v1369 = vpop.f32.mrf.mxu0
      %1370 = vmatprep.mubr.f32.mxu0 0.0
      %1371 = vmatmul.mubr.f32.gmra.mxu0 %v1222
      %v1372 = vpop.f32.mrf.mxu0
      %v1373 = vadd.f32 0.0, %v1372
      %v1374 = vpop.f32.mrf.mxu0
      %1375 = vdwg.mxu0
      %v1376 = vadd.f32 %v1180, %v1291
      %v1377 = vadd.f32 %v1181, %v1293
      %v1378 = vadd.f32 %v1182, %v1368
      %v1379 = vadd.f32 %v1183, %v1297
      %v1380 = vadd.f32 %v1184, %v1299
      %v1381 = vadd.f32 %v1185, %v1373
      %s1382 = scalar_lea.vmem %s1, 96
      %v1383 = vld [vmem:[%s1382] sm:$0xff]
      %v1384 = vld [vmem:[%s1382 + $0x8] sm:$0xff]
      %1385 = vrot.lane.b32.xlu0 %v236, 92
      %v1386 = vpop.permute.xlu0 %1385
      %1387 = vrot.lane.b32.xlu0 %v237, 92
      %v1388 = vpop.permute.xlu0 %1387
      %1389 = vrot.lane.b32.xlu0 %v238, 92
      %v1390 = vpop.permute.xlu0 %1389
      %1391 = vrot.lane.b32.xlu0 %v239, 92
      %v1392 = vpop.permute.xlu0 %1391
      %1393 = vrot.lane.b32.xlu0 %v240, 92
      %v1394 = vpop.permute.xlu0 %1393
      %1395 = vrot.lane.b32.xlu0 %v241, 92
      %v1396 = vpop.permute.xlu0 %1395
      %1397 = vrot.lane.b32.xlu0 %v242, 92
      %v1398 = vpop.permute.xlu0 %1397
      %1399 = vrot.lane.b32.xlu0 %v243, 92
      %v1400 = vpop.permute.xlu0 %1399
      %vm1401 = vcmask 752640
      %v1402 = vsel %vm1401, %v1386, %v1388
      %v1403 = vsel %vm1401, %v1388, %v1390
      %v1404 = vsel %vm1401, %v1390, %v1392
      %v1405 = vsel %vm1401, %v1394, %v1396
      %v1406 = vsel %vm1401, %v1396, %v1398
      %v1407 = vsel %vm1401, %v1398, %v1400
      %v1415 = vsel %vm281, %v1383, 0
      %v1418 = vsel %vm281, %v1384, 0
      %1420 = vmatprep.subr.mxu0 0.0
      %1421 = vmatpush1.msra.mxu0 0.0
      %1422 = vmatprep.subr.mxu0 0.0
      %1423 = vmatpush1.msra.mxu0 0.0
      %1424 = vmatprep.subr.mxu0 0.0
      %1425 = vmatpush1.msra.mxu0 0.0
      %1426 = vmatprep.subr.mxu0 0.0
      %1427 = vmatpush1.msra.mxu0 0.0
      %1428 = vmatprep.subr.mxu0 0.0
      %1429 = vmatpush1.msra.mxu0 0.0
      %1430 = vmatprep.subr.mxu0 0.0
      %1431 = vmatpush1.msra.mxu0 0.0
      %1432 = vmatprep.subr.mxu0 0.0
      %1433 = vmatpush1.msra.mxu0 0.0
      %1434 = vmatprep.subr.mxu0 0.0
      %1435 = vmatpush1.msra.mxu0 0.0
      %1436 = vmatprep.subr.mxu0 0.0
      %1437 = vmatpush1.msra.mxu0 0.0
      %1438 = vmatprep.subr.mxu0 0.0
      %1439 = vmatpush1.msra.mxu0 0.0
      %1440 = vmatprep.subr.mxu0 0.0
      %1441 = vmatpush1.msra.mxu0 0.0
      %1442 = vmatprep.subr.mxu0 0.0
      %1443 = vmatpush1.msra.mxu0 0.0
      %1444 = vmatprep.subr.mxu0 0.0
      %1445 = vmatpush1.msra.mxu0 0.0
      %1446 = vmatprep.subr.mxu0 0.0
      %1447 = vmatpush1.msra.mxu0 0.0
      %1448 = vmatprep.subr.mxu0 %v1406
      %1449 = vmatpush1.msra.mxu0 %v1405
      %1450 = vmatprep.subr.mxu0 %v1403
      %1451 = vmatpush1.msra.mxu0 %v1402
      %1452 = vmatprep.subr.mxu0 0.0
      %1453 = vmatpush2.msra.mxu0 0.0
      %1454 = vmatprep.subr.mxu0 0.0
      %1455 = vmatpush2.msra.mxu0 0.0
      %1456 = vmatprep.subr.mxu0 0.0
      %1457 = vmatpush2.msra.mxu0 0.0
      %1458 = vmatprep.subr.mxu0 0.0
      %1459 = vmatpush2.msra.mxu0 0.0
      %1460 = vmatprep.subr.mxu0 0.0
      %1461 = vmatpush2.msra.mxu0 0.0
      %1462 = vmatprep.subr.mxu0 0.0
      %1463 = vmatpush2.msra.mxu0 0.0
      %1464 = vmatprep.subr.mxu0 0.0
      %1465 = vmatpush2.msra.mxu0 0.0
      %1466 = vmatprep.subr.mxu0 0.0
      %1467 = vmatpush2.msra.mxu0 0.0
      %1468 = vmatprep.subr.mxu0 0.0
      %1469 = vmatpush2.msra.mxu0 0.0
      %1470 = vmatprep.subr.mxu0 0.0
      %1471 = vmatpush2.msra.mxu0 0.0
      %1472 = vmatprep.subr.mxu0 0.0
      %1473 = vmatpush2.msra.mxu0 0.0
      %1474 = vmatprep.subr.mxu0 0.0
      %1475 = vmatpush2.msra.mxu0 0.0
      %1476 = vmatprep.subr.mxu0 0.0
      %1477 = vmatpush2.msra.mxu0 0.0
      %1478 = vmatprep.subr.mxu0 0.0
      %1479 = vmatpush2.msra.mxu0 0.0
      %1480 = vmatprep.subr.mxu0 0.0
      %1481 = vmatpush2.msra.mxu0 0.0
      %1482 = vmatprep.subr.mxu0 0.0
      %1483 = vmatpush2.msra.mxu0 0.0
      %1484 = vmatprep.mubr.f32.mxu0 0.0
      %1485 = vmatmul.mubr.f32.gmra.mxu0 %v1415
      %v1486 = vpop.f32.mrf.mxu0
      %v1487 = vadd.f32 0.0, %v1486
      %v1488 = vpop.f32.mrf.mxu0
      %v1489 = vadd.f32 0.0, %v1488
      %1490 = vmatprep.mubr.f32.mxu0 0.0
      %1491 = vmatmul.mubr.f32.gmra.mxu0 %v1418
      %v1492 = vpop.f32.mrf.mxu0
      %v1493 = vadd.f32 0.0, %v1492
      %v1494 = vpop.f32.mrf.mxu0
      %v1495 = vadd.f32 0.0, %v1494
      %1496 = vdwg.mxu0
      %1497 = vmatprep.subr.mxu0 0.0
      %1498 = vmatpush1.msra.mxu0 0.0
      %1499 = vmatprep.subr.mxu0 0.0
      %1500 = vmatpush1.msra.mxu0 0.0
      %1501 = vmatprep.subr.mxu0 0.0
      %1502 = vmatpush1.msra.mxu0 0.0
      %1503 = vmatprep.subr.mxu0 0.0
      %1504 = vmatpush1.msra.mxu0 0.0
      %1505 = vmatprep.subr.mxu0 0.0
      %1506 = vmatpush1.msra.mxu0 0.0
      %1507 = vmatprep.subr.mxu0 0.0
      %1508 = vmatpush1.msra.mxu0 0.0
      %1509 = vmatprep.subr.mxu0 0.0
      %1510 = vmatpush1.msra.mxu0 0.0
      %1511 = vmatprep.subr.mxu0 0.0
      %1512 = vmatpush1.msra.mxu0 0.0
      %1513 = vmatprep.subr.mxu0 0.0
      %1514 = vmatpush1.msra.mxu0 0.0
      %1515 = vmatprep.subr.mxu0 0.0
      %1516 = vmatpush1.msra.mxu0 0.0
      %1517 = vmatprep.subr.mxu0 0.0
      %1518 = vmatpush1.msra.mxu0 0.0
      %1519 = vmatprep.subr.mxu0 0.0
      %1520 = vmatpush1.msra.mxu0 0.0
      %1521 = vmatprep.subr.mxu0 0.0
      %1522 = vmatpush1.msra.mxu0 0.0
      %1523 = vmatprep.subr.mxu0 0.0
      %1524 = vmatpush1.msra.mxu0 0.0
      %1525 = vmatprep.subr.mxu0 0.0
      %1526 = vmatpush1.msra.mxu0 %v1407
      %1527 = vmatprep.subr.mxu0 0.0
      %1528 = vmatpush1.msra.mxu0 %v1404
      %1529 = vmatprep.subr.mxu0 0.0
      %1530 = vmatpush2.msra.mxu0 0.0
      %1531 = vmatprep.subr.mxu0 0.0
      %1532 = vmatpush2.msra.mxu0 0.0
      %1533 = vmatprep.subr.mxu0 0.0
      %1534 = vmatpush2.msra.mxu0 0.0
      %1535 = vmatprep.subr.mxu0 0.0
      %1536 = vmatpush2.msra.mxu0 0.0
      %1537 = vmatprep.subr.mxu0 0.0
      %1538 = vmatpush2.msra.mxu0 0.0
      %1539 = vmatprep.subr.mxu0 0.0
      %1540 = vmatpush2.msra.mxu0 0.0
      %1541 = vmatprep.subr.mxu0 0.0
      %1542 = vmatpush2.msra.mxu0 0.0
      %1543 = vmatprep.subr.mxu0 0.0
      %1544 = vmatpush2.msra.mxu0 0.0
      %1545 = vmatprep.subr.mxu0 0.0
      %1546 = vmatpush2.msra.mxu0 0.0
      %1547 = vmatprep.subr.mxu0 0.0
      %1548 = vmatpush2.msra.mxu0 0.0
      %1549 = vmatprep.subr.mxu0 0.0
      %1550 = vmatpush2.msra.mxu0 0.0
      %1551 = vmatprep.subr.mxu0 0.0
      %1552 = vmatpush2.msra.mxu0 0.0
      %1553 = vmatprep.subr.mxu0 0.0
      %1554 = vmatpush2.msra.mxu0 0.0
      %1555 = vmatprep.subr.mxu0 0.0
      %1556 = vmatpush2.msra.mxu0 0.0
      %1557 = vmatprep.subr.mxu0 0.0
      %1558 = vmatpush2.msra.mxu0 0.0
      %1559 = vmatprep.subr.mxu0 0.0
      %1560 = vmatpush2.msra.mxu0 0.0
      %1561 = vmatprep.mubr.f32.mxu0 0.0
      %1562 = vmatmul.mubr.f32.gmra.mxu0 %v1415
      %v1563 = vpop.f32.mrf.mxu0
      %v1564 = vadd.f32 0.0, %v1563
      %v1565 = vpop.f32.mrf.mxu0
      %1566 = vmatprep.mubr.f32.mxu0 0.0
      %1567 = vmatmul.mubr.f32.gmra.mxu0 %v1418
      %v1568 = vpop.f32.mrf.mxu0
      %v1569 = vadd.f32 0.0, %v1568
      %v1570 = vpop.f32.mrf.mxu0
      %1571 = vdwg.mxu0
      %v1572 = vadd.f32 %v1376, %v1487
      %v1573 = vadd.f32 %v1377, %v1489
      %v1574 = vadd.f32 %v1378, %v1564
      %v1575 = vadd.f32 %v1379, %v1493
      %v1576 = vadd.f32 %v1380, %v1495
      %v1577 = vadd.f32 %v1381, %v1569
      %s1578 = scalar_lea.vmem %s1, 112
      %v1579 = vld [vmem:[%s1578] sm:$0xff]
      %v1580 = vld [vmem:[%s1578 + $0x8] sm:$0xff]
      %1581 = vrot.lane.b32.xlu0 %v236, 91
      %v1582 = vpop.permute.xlu0 %1581
      %1583 = vrot.lane.b32.xlu0 %v237, 91
      %v1584 = vpop.permute.xlu0 %1583
      %1585 = vrot.lane.b32.xlu0 %v238, 91
      %v1586 = vpop.permute.xlu0 %1585
      %1587 = vrot.lane.b32.xlu0 %v239, 91
      %v1588 = vpop.permute.xlu0 %1587
      %1589 = vrot.lane.b32.xlu0 %v240, 91
      %v1590 = vpop.permute.xlu0 %1589
      %1591 = vrot.lane.b32.xlu0 %v241, 91
      %v1592 = vpop.permute.xlu0 %1591
      %1593 = vrot.lane.b32.xlu0 %v242, 91
      %v1594 = vpop.permute.xlu0 %1593
      %1595 = vrot.lane.b32.xlu0 %v243, 91
      %v1596 = vpop.permute.xlu0 %1595
      %vm1597 = vcmask 744448
      %v1598 = vsel %vm1597, %v1582, %v1584
      %v1599 = vsel %vm1597, %v1584, %v1586
      %v1600 = vsel %vm1597, %v1586, %v1588
      %v1601 = vsel %vm1597, %v1590, %v1592
      %v1602 = vsel %vm1597, %v1592, %v1594
      %v1603 = vsel %vm1597, %v1594, %v1596
      %v1611 = vsel %vm281, %v1579, 0
      %v1614 = vsel %vm281, %v1580, 0
      %1616 = vmatprep.subr.mxu0 0.0
      %1617 = vmatpush1.msra.mxu0 0.0
      %1618 = vmatprep.subr.mxu0 0.0
      %1619 = vmatpush1.msra.mxu0 0.0
      %1620 = vmatprep.subr.mxu0 0.0
      %1621 = vmatpush1.msra.mxu0 0.0
      %1622 = vmatprep.subr.mxu0 0.0
      %1623 = vmatpush1.msra.mxu0 0.0
      %1624 = vmatprep.subr.mxu0 0.0
      %1625 = vmatpush1.msra.mxu0 0.0
      %1626 = vmatprep.subr.mxu0 0.0
      %1627 = vmatpush1.msra.mxu0 0.0
      %1628 = vmatprep.subr.mxu0 0.0
      %1629 = vmatpush1.msra.mxu0 0.0
      %1630 = vmatprep.subr.mxu0 0.0
      %1631 = vmatpush1.msra.mxu0 0.0
      %1632 = vmatprep.subr.mxu0 0.0
      %1633 = vmatpush1.msra.mxu0 0.0
      %1634 = vmatprep.subr.mxu0 0.0
      %1635 = vmatpush1.msra.mxu0 0.0
      %1636 = vmatprep.subr.mxu0 0.0
      %1637 = vmatpush1.msra.mxu0 0.0
      %1638 = vmatprep.subr.mxu0 0.0
      %1639 = vmatpush1.msra.mxu0 0.0
      %1640 = vmatprep.subr.mxu0 0.0
      %1641 = vmatpush1.msra.mxu0 0.0
      %1642 = vmatprep.subr.mxu0 0.0
      %1643 = vmatpush1.msra.mxu0 0.0
      %1644 = vmatprep.subr.mxu0 %v1602
      %1645 = vmatpush1.msra.mxu0 %v1601
      %1646 = vmatprep.subr.mxu0 %v1599
      %1647 = vmatpush1.msra.mxu0 %v1598
      %1648 = vmatprep.subr.mxu0 0.0
      %1649 = vmatpush2.msra.mxu0 0.0
      %1650 = vmatprep.subr.mxu0 0.0
      %1651 = vmatpush2.msra.mxu0 0.0
      %1652 = vmatprep.subr.mxu0 0.0
      %1653 = vmatpush2.msra.mxu0 0.0
      %1654 = vmatprep.subr.mxu0 0.0
      %1655 = vmatpush2.msra.mxu0 0.0
      %1656 = vmatprep.subr.mxu0 0.0
      %1657 = vmatpush2.msra.mxu0 0.0
      %1658 = vmatprep.subr.mxu0 0.0
      %1659 = vmatpush2.msra.mxu0 0.0
      %1660 = vmatprep.subr.mxu0 0.0
      %1661 = vmatpush2.msra.mxu0 0.0
      %1662 = vmatprep.subr.mxu0 0.0
      %1663 = vmatpush2.msra.mxu0 0.0
      %1664 = vmatprep.subr.mxu0 0.0
      %1665 = vmatpush2.msra.mxu0 0.0
      %1666 = vmatprep.subr.mxu0 0.0
      %1667 = vmatpush2.msra.mxu0 0.0
      %1668 = vmatprep.subr.mxu0 0.0
      %1669 = vmatpush2.msra.mxu0 0.0
      %1670 = vmatprep.subr.mxu0 0.0
      %1671 = vmatpush2.msra.mxu0 0.0
      %1672 = vmatprep.subr.mxu0 0.0
      %1673 = vmatpush2.msra.mxu0 0.0
      %1674 = vmatprep.subr.mxu0 0.0
      %1675 = vmatpush2.msra.mxu0 0.0
      %1676 = vmatprep.subr.mxu0 0.0
      %1677 = vmatpush2.msra.mxu0 0.0
      %1678 = vmatprep.subr.mxu0 0.0
      %1679 = vmatpush2.msra.mxu0 0.0
      %1680 = vmatprep.mubr.f32.mxu0 0.0
      %1681 = vmatmul.mubr.f32.gmra.mxu0 %v1611
      %v1682 = vpop.f32.mrf.mxu0
      %v1683 = vadd.f32 0.0, %v1682
      %v1684 = vpop.f32.mrf.mxu0
      %v1685 = vadd.f32 0.0, %v1684
      %1686 = vmatprep.mubr.f32.mxu0 0.0
      %1687 = vmatmul.mubr.f32.gmra.mxu0 %v1614
      %v1688 = vpop.f32.mrf.mxu0
      %v1689 = vadd.f32 0.0, %v1688
      %v1690 = vpop.f32.mrf.mxu0
      %v1691 = vadd.f32 0.0, %v1690
      %1692 = vdwg.mxu0
      %1693 = vmatprep.subr.mxu0 0.0
      %1694 = vmatpush1.msra.mxu0 0.0
      %1695 = vmatprep.subr.mxu0 0.0
      %1696 = vmatpush1.msra.mxu0 0.0
      %1697 = vmatprep.subr.mxu0 0.0
      %1698 = vmatpush1.msra.mxu0 0.0
      %1699 = vmatprep.subr.mxu0 0.0
      %1700 = vmatpush1.msra.mxu0 0.0
      %1701 = vmatprep.subr.mxu0 0.0
      %1702 = vmatpush1.msra.mxu0 0.0
      %1703 = vmatprep.subr.mxu0 0.0
      %1704 = vmatpush1.msra.mxu0 0.0
      %1705 = vmatprep.subr.mxu0 0.0
      %1706 = vmatpush1.msra.mxu0 0.0
      %1707 = vmatprep.subr.mxu0 0.0
      %1708 = vmatpush1.msra.mxu0 0.0
      %1709 = vmatprep.subr.mxu0 0.0
      %1710 = vmatpush1.msra.mxu0 0.0
      %1711 = vmatprep.subr.mxu0 0.0
      %1712 = vmatpush1.msra.mxu0 0.0
      %1713 = vmatprep.subr.mxu0 0.0
      %1714 = vmatpush1.msra.mxu0 0.0
      %1715 = vmatprep.subr.mxu0 0.0
      %1716 = vmatpush1.msra.mxu0 0.0
      %1717 = vmatprep.subr.mxu0 0.0
      %1718 = vmatpush1.msra.mxu0 0.0
      %1719 = vmatprep.subr.mxu0 0.0
      %1720 = vmatpush1.msra.mxu0 0.0
      %1721 = vmatprep.subr.mxu0 0.0
      %1722 = vmatpush1.msra.mxu0 %v1603
      %1723 = vmatprep.subr.mxu0 0.0
      %1724 = vmatpush1.msra.mxu0 %v1600
      %1725 = vmatprep.subr.mxu0 0.0
      %1726 = vmatpush2.msra.mxu0 0.0
      %1727 = vmatprep.subr.mxu0 0.0
      %1728 = vmatpush2.msra.mxu0 0.0
      %1729 = vmatprep.subr.mxu0 0.0
      %1730 = vmatpush2.msra.mxu0 0.0
      %1731 = vmatprep.subr.mxu0 0.0
      %1732 = vmatpush2.msra.mxu0 0.0
      %1733 = vmatprep.subr.mxu0 0.0
      %1734 = vmatpush2.msra.mxu0 0.0
      %1735 = vmatprep.subr.mxu0 0.0
      %1736 = vmatpush2.msra.mxu0 0.0
      %1737 = vmatprep.subr.mxu0 0.0
      %1738 = vmatpush2.msra.mxu0 0.0
      %1739 = vmatprep.subr.mxu0 0.0
      %1740 = vmatpush2.msra.mxu0 0.0
      %1741 = vmatprep.subr.mxu0 0.0
      %1742 = vmatpush2.msra.mxu0 0.0
      %1743 = vmatprep.subr.mxu0 0.0
      %1744 = vmatpush2.msra.mxu0 0.0
      %1745 = vmatprep.subr.mxu0 0.0
      %1746 = vmatpush2.msra.mxu0 0.0
      %1747 = vmatprep.subr.mxu0 0.0
      %1748 = vmatpush2.msra.mxu0 0.0
      %1749 = vmatprep.subr.mxu0 0.0
      %1750 = vmatpush2.msra.mxu0 0.0
      %1751 = vmatprep.subr.mxu0 0.0
      %1752 = vmatpush2.msra.mxu0 0.0
      %1753 = vmatprep.subr.mxu0 0.0
      %1754 = vmatpush2.msra.mxu0 0.0
      %1755 = vmatprep.subr.mxu0 0.0
      %1756 = vmatpush2.msra.mxu0 0.0
      %1757 = vmatprep.mubr.f32.mxu0 0.0
      %1758 = vmatmul.mubr.f32.gmra.mxu0 %v1611
      %v1759 = vpop.f32.mrf.mxu0
      %v1760 = vadd.f32 0.0, %v1759
      %v1761 = vpop.f32.mrf.mxu0
      %1762 = vmatprep.mubr.f32.mxu0 0.0
      %1763 = vmatmul.mubr.f32.gmra.mxu0 %v1614
      %v1764 = vpop.f32.mrf.mxu0
      %v1765 = vadd.f32 0.0, %v1764
      %v1766 = vpop.f32.mrf.mxu0
      %1767 = vdwg.mxu0
      %v1768 = vadd.f32 %v1572, %v1683
      %v1769 = vadd.f32 %v1573, %v1685
      %v1770 = vadd.f32 %v1574, %v1760
      %v1771 = vadd.f32 %v1575, %v1689
      %v1772 = vadd.f32 %v1576, %v1691
      %v1773 = vadd.f32 %v1577, %v1765
      %s1774 = scalar_lea.vmem %s1, 128
      %v1775 = vld [vmem:[%s1774] sm:$0xff]
      %v1776 = vld [vmem:[%s1774 + $0x8] sm:$0xff]
      %1777 = vrot.lane.b32.xlu0 %v236, 90
      %v1778 = vpop.permute.xlu0 %1777
      %1779 = vrot.lane.b32.xlu0 %v237, 90
      %v1780 = vpop.permute.xlu0 %1779
      %1781 = vrot.lane.b32.xlu0 %v238, 90
      %v1782 = vpop.permute.xlu0 %1781
      %1783 = vrot.lane.b32.xlu0 %v239, 90
      %v1784 = vpop.permute.xlu0 %1783
      %1785 = vrot.lane.b32.xlu0 %v240, 90
      %v1786 = vpop.permute.xlu0 %1785
      %1787 = vrot.lane.b32.xlu0 %v241, 90
      %v1788 = vpop.permute.xlu0 %1787
      %1789 = vrot.lane.b32.xlu0 %v242, 90
      %v1790 = vpop.permute.xlu0 %1789
      %1791 = vrot.lane.b32.xlu0 %v243, 90
      %v1792 = vpop.permute.xlu0 %1791
      %vm1793 = vcmask 736256
      %v1794 = vsel %vm1793, %v1778, %v1780
      %v1795 = vsel %vm1793, %v1780, %v1782
      %v1796 = vsel %vm1793, %v1782, %v1784
      %v1797 = vsel %vm1793, %v1786, %v1788
      %v1798 = vsel %vm1793, %v1788, %v1790
      %v1799 = vsel %vm1793, %v1790, %v1792
      %v1807 = vsel %vm281, %v1775, 0
      %v1810 = vsel %vm281, %v1776, 0
      %1812 = vmatprep.subr.mxu0 0.0
      %1813 = vmatpush1.msra.mxu0 0.0
      %1814 = vmatprep.subr.mxu0 0.0
      %1815 = vmatpush1.msra.mxu0 0.0
      %1816 = vmatprep.subr.mxu0 0.0
      %1817 = vmatpush1.msra.mxu0 0.0
      %1818 = vmatprep.subr.mxu0 0.0
      %1819 = vmatpush1.msra.mxu0 0.0
      %1820 = vmatprep.subr.mxu0 0.0
      %1821 = vmatpush1.msra.mxu0 0.0
      %1822 = vmatprep.subr.mxu0 0.0
      %1823 = vmatpush1.msra.mxu0 0.0
      %1824 = vmatprep.subr.mxu0 0.0
      %1825 = vmatpush1.msra.mxu0 0.0
      %1826 = vmatprep.subr.mxu0 0.0
      %1827 = vmatpush1.msra.mxu0 0.0
      %1828 = vmatprep.subr.mxu0 0.0
      %1829 = vmatpush1.msra.mxu0 0.0
      %1830 = vmatprep.subr.mxu0 0.0
      %1831 = vmatpush1.msra.mxu0 0.0
      %1832 = vmatprep.subr.mxu0 0.0
      %1833 = vmatpush1.msra.mxu0 0.0
      %1834 = vmatprep.subr.mxu0 0.0
      %1835 = vmatpush1.msra.mxu0 0.0
      %1836 = vmatprep.subr.mxu0 0.0
      %1837 = vmatpush1.msra.mxu0 0.0
      %1838 = vmatprep.subr.mxu0 0.0
      %1839 = vmatpush1.msra.mxu0 0.0
      %1840 = vmatprep.subr.mxu0 %v1798
      %1841 = vmatpush1.msra.mxu0 %v1797
      %1842 = vmatprep.subr.mxu0 %v1795
      %1843 = vmatpush1.msra.mxu0 %v1794
      %1844 = vmatprep.subr.mxu0 0.0
      %1845 = vmatpush2.msra.mxu0 0.0
      %1846 = vmatprep.subr.mxu0 0.0
      %1847 = vmatpush2.msra.mxu0 0.0
      %1848 = vmatprep.subr.mxu0 0.0
      %1849 = vmatpush2.msra.mxu0 0.0
      %1850 = vmatprep.subr.mxu0 0.0
      %1851 = vmatpush2.msra.mxu0 0.0
      %1852 = vmatprep.subr.mxu0 0.0
      %1853 = vmatpush2.msra.mxu0 0.0
      %1854 = vmatprep.subr.mxu0 0.0
      %1855 = vmatpush2.msra.mxu0 0.0
      %1856 = vmatprep.subr.mxu0 0.0
      %1857 = vmatpush2.msra.mxu0 0.0
      %1858 = vmatprep.subr.mxu0 0.0
      %1859 = vmatpush2.msra.mxu0 0.0
      %1860 = vmatprep.subr.mxu0 0.0
      %1861 = vmatpush2.msra.mxu0 0.0
      %1862 = vmatprep.subr.mxu0 0.0
      %1863 = vmatpush2.msra.mxu0 0.0
      %1864 = vmatprep.subr.mxu0 0.0
      %1865 = vmatpush2.msra.mxu0 0.0
      %1866 = vmatprep.subr.mxu0 0.0
      %1867 = vmatpush2.msra.mxu0 0.0
      %1868 = vmatprep.subr.mxu0 0.0
      %1869 = vmatpush2.msra.mxu0 0.0
      %1870 = vmatprep.subr.mxu0 0.0
      %1871 = vmatpush2.msra.mxu0 0.0
      %1872 = vmatprep.subr.mxu0 0.0
      %1873 = vmatpush2.msra.mxu0 0.0
      %1874 = vmatprep.subr.mxu0 0.0
      %1875 = vmatpush2.msra.mxu0 0.0
      %1876 = vmatprep.mubr.f32.mxu0 0.0
      %1877 = vmatmul.mubr.f32.gmra.mxu0 %v1807
      %v1878 = vpop.f32.mrf.mxu0
      %v1879 = vadd.f32 0.0, %v1878
      %v1880 = vpop.f32.mrf.mxu0
      %v1881 = vadd.f32 0.0, %v1880
      %1882 = vmatprep.mubr.f32.mxu0 0.0
      %1883 = vmatmul.mubr.f32.gmra.mxu0 %v1810
      %v1884 = vpop.f32.mrf.mxu0
      %v1885 = vadd.f32 0.0, %v1884
      %v1886 = vpop.f32.mrf.mxu0
      %v1887 = vadd.f32 0.0, %v1886
      %1888 = vdwg.mxu0
      %1889 = vmatprep.subr.mxu0 0.0
      %1890 = vmatpush1.msra.mxu0 0.0
      %1891 = vmatprep.subr.mxu0 0.0
      %1892 = vmatpush1.msra.mxu0 0.0
      %1893 = vmatprep.subr.mxu0 0.0
      %1894 = vmatpush1.msra.mxu0 0.0
      %1895 = vmatprep.subr.mxu0 0.0
      %1896 = vmatpush1.msra.mxu0 0.0
      %1897 = vmatprep.subr.mxu0 0.0
      %1898 = vmatpush1.msra.mxu0 0.0
      %1899 = vmatprep.subr.mxu0 0.0
      %1900 = vmatpush1.msra.mxu0 0.0
      %1901 = vmatprep.subr.mxu0 0.0
      %1902 = vmatpush1.msra.mxu0 0.0
      %1903 = vmatprep.subr.mxu0 0.0
      %1904 = vmatpush1.msra.mxu0 0.0
      %1905 = vmatprep.subr.mxu0 0.0
      %1906 = vmatpush1.msra.mxu0 0.0
      %1907 = vmatprep.subr.mxu0 0.0
      %1908 = vmatpush1.msra.mxu0 0.0
      %1909 = vmatprep.subr.mxu0 0.0
      %1910 = vmatpush1.msra.mxu0 0.0
      %1911 = vmatprep.subr.mxu0 0.0
      %1912 = vmatpush1.msra.mxu0 0.0
      %1913 = vmatprep.subr.mxu0 0.0
      %1914 = vmatpush1.msra.mxu0 0.0
      %1915 = vmatprep.subr.mxu0 0.0
      %1916 = vmatpush1.msra.mxu0 0.0
      %1917 = vmatprep.subr.mxu0 0.0
      %1918 = vmatpush1.msra.mxu0 %v1799
      %1919 = vmatprep.subr.mxu0 0.0
      %1920 = vmatpush1.msra.mxu0 %v1796
      %1921 = vmatprep.subr.mxu0 0.0
      %1922 = vmatpush2.msra.mxu0 0.0
      %1923 = vmatprep.subr.mxu0 0.0
      %1924 = vmatpush2.msra.mxu0 0.0
      %1925 = vmatprep.subr.mxu0 0.0
      %1926 = vmatpush2.msra.mxu0 0.0
      %1927 = vmatprep.subr.mxu0 0.0
      %1928 = vmatpush2.msra.mxu0 0.0
      %1929 = vmatprep.subr.mxu0 0.0
      %1930 = vmatpush2.msra.mxu0 0.0
      %1931 = vmatprep.subr.mxu0 0.0
      %1932 = vmatpush2.msra.mxu0 0.0
      %1933 = vmatprep.subr.mxu0 0.0
      %1934 = vmatpush2.msra.mxu0 0.0
      %1935 = vmatprep.subr.mxu0 0.0
      %1936 = vmatpush2.msra.mxu0 0.0
      %1937 = vmatprep.subr.mxu0 0.0
      %1938 = vmatpush2.msra.mxu0 0.0
      %1939 = vmatprep.subr.mxu0 0.0
      %1940 = vmatpush2.msra.mxu0 0.0
      %1941 = vmatprep.subr.mxu0 0.0
      %1942 = vmatpush2.msra.mxu0 0.0
      %1943 = vmatprep.subr.mxu0 0.0
      %1944 = vmatpush2.msra.mxu0 0.0
      %1945 = vmatprep.subr.mxu0 0.0
      %1946 = vmatpush2.msra.mxu0 0.0
      %1947 = vmatprep.subr.mxu0 0.0
      %1948 = vmatpush2.msra.mxu0 0.0
      %1949 = vmatprep.subr.mxu0 0.0
      %1950 = vmatpush2.msra.mxu0 0.0
      %1951 = vmatprep.subr.mxu0 0.0
      %1952 = vmatpush2.msra.mxu0 0.0
      %1953 = vmatprep.mubr.f32.mxu0 0.0
      %1954 = vmatmul.mubr.f32.gmra.mxu0 %v1807
      %v1955 = vpop.f32.mrf.mxu0
      %v1956 = vadd.f32 0.0, %v1955
      %v1957 = vpop.f32.mrf.mxu0
      %1958 = vmatprep.mubr.f32.mxu0 0.0
      %1959 = vmatmul.mubr.f32.gmra.mxu0 %v1810
      %v1960 = vpop.f32.mrf.mxu0
      %v1961 = vadd.f32 0.0, %v1960
      %v1962 = vpop.f32.mrf.mxu0
      %1963 = vdwg.mxu0
      %v1964 = vadd.f32 %v1768, %v1879
      %v1965 = vadd.f32 %v1769, %v1881
      %v1966 = vadd.f32 %v1770, %v1956
      %v1967 = vadd.f32 %v1771, %v1885
      %v1968 = vadd.f32 %v1772, %v1887
      %v1969 = vadd.f32 %v1773, %v1961
      %v1970 = vld [vmem:[%s2] sm:$0xff]
      %v1971 = vld [vmem:[%s2 + $0x8] sm:$0xff]
      %1973 = vset.pattern.permute.xlu0 0
      %1974 = vperm.xlu0 %1973, %v1970
      %v1975 = vpop.permute.xlu0 %1974
      %1978 = vset.pattern.permute.xlu0 0
      %1979 = vperm.xlu0 %1978, %v1971
      %v1980 = vpop.permute.xlu0 %1979
      %v1982 = vadd.f32 %v1964, %v1975
      %v1983 = vadd.f32 %v1965, %v1975
      %v1984 = vadd.f32 %v1966, %v1975
      %v1985 = vadd.f32 %v1967, %v1980
      %v1986 = vadd.f32 %v1968, %v1980
      %v1987 = vadd.f32 %v1969, %v1980
      %v1988 = vmax.f32 %v1982, 0.0
      %v1989 = vmax.f32 %v1983, 0.0
      %v1990 = vmax.f32 %v1984, 0.0
      %v1991 = vmax.f32 %v1985, 0.0
      %v1992 = vmax.f32 %v1986, 0.0
      %v1993 = vmax.f32 %v1987, 0.0
      %v1994 = vld [vmem:[%s3] sm:$0xff]
      %v1995 = vld [vmem:[%s4] sm:$0xff]
      %1997 = vset.pattern.permute.xlu0 0
      %1998 = vperm.xlu0 %1997, %v1995
      %v1999 = vpop.permute.xlu0 %1998
      %v2002 = vsel %vm281, %v1994, 0
      %2004 = vmatprep.subr.mxu0 0.0
      %2005 = vmatpush1.msra.mxu0 0.0
      %2006 = vmatprep.subr.mxu0 0.0
      %2007 = vmatpush1.msra.mxu0 0.0
      %2008 = vmatprep.subr.mxu0 0.0
      %2009 = vmatpush1.msra.mxu0 0.0
      %2010 = vmatprep.subr.mxu0 0.0
      %2011 = vmatpush1.msra.mxu0 0.0
      %2012 = vmatprep.subr.mxu0 0.0
      %2013 = vmatpush1.msra.mxu0 0.0
      %2014 = vmatprep.subr.mxu0 0.0
      %2015 = vmatpush1.msra.mxu0 0.0
      %2016 = vmatprep.subr.mxu0 0.0
      %2017 = vmatpush1.msra.mxu0 0.0
      %2018 = vmatprep.subr.mxu0 0.0
      %2019 = vmatpush1.msra.mxu0 0.0
      %2020 = vmatprep.subr.mxu0 0.0
      %2021 = vmatpush1.msra.mxu0 0.0
      %2022 = vmatprep.subr.mxu0 0.0
      %2023 = vmatpush1.msra.mxu0 0.0
      %2024 = vmatprep.subr.mxu0 0.0
      %2025 = vmatpush1.msra.mxu0 0.0
      %2026 = vmatprep.subr.mxu0 0.0
      %2027 = vmatpush1.msra.mxu0 0.0
      %2028 = vmatprep.subr.mxu0 0.0
      %2029 = vmatpush1.msra.mxu0 0.0
      %2030 = vmatprep.subr.mxu0 0.0
      %2031 = vmatpush1.msra.mxu0 0.0
      %2032 = vmatprep.subr.mxu0 %v1992
      %2033 = vmatpush1.msra.mxu0 %v1991
      %2034 = vmatprep.subr.mxu0 %v1989
      %2035 = vmatpush1.msra.mxu0 %v1988
      %2036 = vmatprep.subr.mxu0 0.0
      %2037 = vmatpush2.msra.mxu0 0.0
      %2038 = vmatprep.subr.mxu0 0.0
      %2039 = vmatpush2.msra.mxu0 0.0
      %2040 = vmatprep.subr.mxu0 0.0
      %2041 = vmatpush2.msra.mxu0 0.0
      %2042 = vmatprep.subr.mxu0 0.0
      %2043 = vmatpush2.msra.mxu0 0.0
      %2044 = vmatprep.subr.mxu0 0.0
      %2045 = vmatpush2.msra.mxu0 0.0
      %2046 = vmatprep.subr.mxu0 0.0
      %2047 = vmatpush2.msra.mxu0 0.0
      %2048 = vmatprep.subr.mxu0 0.0
      %2049 = vmatpush2.msra.mxu0 0.0
      %2050 = vmatprep.subr.mxu0 0.0
      %2051 = vmatpush2.msra.mxu0 0.0
      %2052 = vmatprep.subr.mxu0 0.0
      %2053 = vmatpush2.msra.mxu0 0.0
      %2054 = vmatprep.subr.mxu0 0.0
      %2055 = vmatpush2.msra.mxu0 0.0
      %2056 = vmatprep.subr.mxu0 0.0
      %2057 = vmatpush2.msra.mxu0 0.0
      %2058 = vmatprep.subr.mxu0 0.0
      %2059 = vmatpush2.msra.mxu0 0.0
      %2060 = vmatprep.subr.mxu0 0.0
      %2061 = vmatpush2.msra.mxu0 0.0
      %2062 = vmatprep.subr.mxu0 0.0
      %2063 = vmatpush2.msra.mxu0 0.0
      %2064 = vmatprep.subr.mxu0 0.0
      %2065 = vmatpush2.msra.mxu0 0.0
      %2066 = vmatprep.subr.mxu0 0.0
      %2067 = vmatpush2.msra.mxu0 0.0
      %2068 = vmatprep.mubr.f32.mxu0 0.0
      %2069 = vmatmul.mubr.f32.gmra.mxu0 %v2002
      %v2070 = vpop.f32.mrf.mxu0
      %v2071 = vadd.f32 %v1999, %v2070
      %v2072 = vpop.f32.mrf.mxu0
      %v2073 = vadd.f32 %v1999, %v2072
      %2074 = vdwg.mxu0
      %2075 = vmatprep.subr.mxu0 0.0
      %2076 = vmatpush1.msra.mxu0 0.0
      %2077 = vmatprep.subr.mxu0 0.0
      %2078 = vmatpush1.msra.mxu0 0.0
      %2079 = vmatprep.subr.mxu0 0.0
      %2080 = vmatpush1.msra.mxu0 0.0
      %2081 = vmatprep.subr.mxu0 0.0
      %2082 = vmatpush1.msra.mxu0 0.0
      %2083 = vmatprep.subr.mxu0 0.0
      %2084 = vmatpush1.msra.mxu0 0.0
      %2085 = vmatprep.subr.mxu0 0.0
      %2086 = vmatpush1.msra.mxu0 0.0
      %2087 = vmatprep.subr.mxu0 0.0
      %2088 = vmatpush1.msra.mxu0 0.0
      %2089 = vmatprep.subr.mxu0 0.0
      %2090 = vmatpush1.msra.mxu0 0.0
      %2091 = vmatprep.subr.mxu0 0.0
      %2092 = vmatpush1.msra.mxu0 0.0
      %2093 = vmatprep.subr.mxu0 0.0
      %2094 = vmatpush1.msra.mxu0 0.0
      %2095 = vmatprep.subr.mxu0 0.0
      %2096 = vmatpush1.msra.mxu0 0.0
      %2097 = vmatprep.subr.mxu0 0.0
      %2098 = vmatpush1.msra.mxu0 0.0
      %2099 = vmatprep.subr.mxu0 0.0
      %2100 = vmatpush1.msra.mxu0 0.0
      %2101 = vmatprep.subr.mxu0 0.0
      %2102 = vmatpush1.msra.mxu0 0.0
      %2103 = vmatprep.subr.mxu0 0.0
      %2104 = vmatpush1.msra.mxu0 %v1993
      %2105 = vmatprep.subr.mxu0 0.0
      %2106 = vmatpush1.msra.mxu0 %v1990
      %2107 = vmatprep.subr.mxu0 0.0
      %2108 = vmatpush2.msra.mxu0 0.0
      %2109 = vmatprep.subr.mxu0 0.0
      %2110 = vmatpush2.msra.mxu0 0.0
      %2111 = vmatprep.subr.mxu0 0.0
      %2112 = vmatpush2.msra.mxu0 0.0
      %2113 = vmatprep.subr.mxu0 0.0
      %2114 = vmatpush2.msra.mxu0 0.0
      %2115 = vmatprep.subr.mxu0 0.0
      %2116 = vmatpush2.msra.mxu0 0.0
      %2117 = vmatprep.subr.mxu0 0.0
      %2118 = vmatpush2.msra.mxu0 0.0
      %2119 = vmatprep.subr.mxu0 0.0
      %2120 = vmatpush2.msra.mxu0 0.0
      %2121 = vmatprep.subr.mxu0 0.0
      %2122 = vmatpush2.msra.mxu0 0.0
      %2123 = vmatprep.subr.mxu0 0.0
      %2124 = vmatpush2.msra.mxu0 0.0
      %2125 = vmatprep.subr.mxu0 0.0
      %2126 = vmatpush2.msra.mxu0 0.0
      %2127 = vmatprep.subr.mxu0 0.0
      %2128 = vmatpush2.msra.mxu0 0.0
      %2129 = vmatprep.subr.mxu0 0.0
      %2130 = vmatpush2.msra.mxu0 0.0
      %2131 = vmatprep.subr.mxu0 0.0
      %2132 = vmatpush2.msra.mxu0 0.0
      %2133 = vmatprep.subr.mxu0 0.0
      %2134 = vmatpush2.msra.mxu0 0.0
      %2135 = vmatprep.subr.mxu0 0.0
      %2136 = vmatpush2.msra.mxu0 0.0
      %2137 = vmatprep.subr.mxu0 0.0
      %2138 = vmatpush2.msra.mxu0 0.0
      %2139 = vmatprep.mubr.f32.mxu0 0.0
      %2140 = vmatmul.mubr.f32.gmra.mxu0 %v2002
      %v2141 = vpop.f32.mrf.mxu0
      %v2142 = vadd.f32 %v1999, %v2141
      %v2143 = vpop.f32.mrf.mxu0
      %2144 = vdwg.mxu0
      %2145 = vst [vmem:[%s224] sm:$0xff] %v2071
      %2146 = vst [vmem:[%s224 + $0x8] sm:$0xff] %v2073
      %2147 = vst [vmem:[%s224 + $0x10] sm:$0xff] %v2142
      %p2148 = scmp.lt.s32.totalorder %s16, 1
      %s2149 = scalar_select %p2148, %s16, 1
      %s2150 = smul.addr %s2149, 3
      %s2151 = smul.addr %s2150, 8
      %s2152 = scalar_lea.vmem %s5, %s2151
      // Predicated region
      $region41: #{multitask_head_forward.1} parent=39 // pred_check
        %p2153 = pneg %p144
      $region42: #{multitask_head_forward.1} parent=39 // pred_check_branch
        %2155 = sbr.rel (%p2153) target = $region44
      $region43: #{multitask_head_forward.1} parent=39 // pred_region
        _
      $region44: #{multitask_head_forward.1} parent=39 // pred_fallthru
        _
    $region40: #{multitask_head_forward.1} parent=5 // pred_fallthru
      _
    %p2156 = scmp.le.s32.totalorder 2, %s11
    // Predicated region
    $region45: #{multitask_head_forward.1} parent=5 // pred_check
      %p2157 = pneg %p2156
    $region46: #{multitask_head_forward.1} parent=5 // pred_check_branch
      %2159 = sbr.rel (%p2157) target = $region48
    $region47: #{multitask_head_forward.1} parent=5 // pred_region
      %s2160 = ssub.s32 %s11, 2
      // Predicated region
      $region49: #{multitask_head_forward.1} parent=47 // pred_check
        %p2161 = pneg %p150
      $region50: #{multitask_head_forward.1} parent=47 // pred_check_branch
        %2163 = sbr.rel (%p2161) target = $region52
      $region51: #{multitask_head_forward.1} parent=47 // pred_region
        %p2164 = scmp.lt.s32.totalorder %s17, 1
        %s2165 = scalar_select %p2164, %s17, 1
        %s2166 = smul.addr %s2165, 3
        %s2167 = smul.addr %s2166, 8
        %s2168 = scalar_lea.vmem %s5, %s2167
      $region52: #{multitask_head_forward.1} parent=47 // pred_fallthru
        _
    $region48: #{multitask_head_forward.1} parent=5 // pred_fallthru
      _
  $region6: #{multitask_head_forward.1} parent=0 // loop_footer
    %s15 = sadd.s32 1, %s11
  $region7: #{multitask_head_forward.1} parent=0 // loop_footer_branch
    %10 = sbr.rel target = $region3
  $region8: #{multitask_head_forward.1} parent=0 // loop_exit
    _

</llo_original>
